<compile_context>
chip_gen: v5e
topology: v5e:2x2
jax: 0.10.0
libtpu: 0.0.40
codegen_flags: <defaults>
</compile_context>

<pallas_src>
import functools
from dataclasses import dataclass

import jax
import jax.numpy as jnp
from jax.experimental import pallas as pl
from jax.experimental.pallas import tpu as pltpu


# ----------------------------------------------------------------------------
# Config (mirrors the `args` namespace of the PyTorch model)
# ----------------------------------------------------------------------------
@dataclass(frozen=True)
class Config:
    num_nodes: int = 8
    input_dim: int = 1
    output_dim: int = 1          # must be 1 (PyTorch squeeze(1)) and == input_dim
    rnn_units: int = 32          # hidden dim H of DASTNCell
    lag: int = 4                 # encoder sequence length T
    lag2: int = 3                # local-window length (seq_len2)
    input_dim_A: int = 4         # RGNCell state dim (DA)
    hidden_dim_A: int = 16       # RGNCell readout dim (DAh)
    head_num_A: int = 2          # unused by the stand-in cell
    cheb_k: int = 2              # unused by the stand-in cell (SC == identity)
    embed_dim: int = 8           # unused by the stand-in cell
    embed_dim_t: int = 4         # unused by the stand-in cell
    horizon: int = 2
    num_layers: int = 1


_WEIGHT_NAMES = (
    "WrR_in", "WrR_st", "bR",            # RGN readout head (exact DAh width)
    "WrS_in", "WrS_st", "bS",            # RGN state head   (exact DA width)
    "Wx_zg", "WR_zg", "Wh_zg", "b_zg",   # z|g gates        (exact 2H width)
    "Wx_c", "WR_c", "Wgh_c", "b_c",      # candidate gate   (exact H width)
    "wend", "bend",                      # end_conv: Conv2d(1, 1, (1, H))
)


# ----------------------------------------------------------------------------
# Tiny-K contraction helpers (VPU broadcast-FMAs; keep the MXU free)
# ----------------------------------------------------------------------------
def _as_cols(x, k):
    """Normalise an (M, K) array or a list of K (M, 1) columns to a column list."""
    if isinstance(x, (list, tuple)):
        return list(x)
    return [x[:, j:j + 1] for j in range(k)]


def _small_dot(x, rows):
    """(M, K) @ (K, F) with tiny K, `rows` pre-broadcast to (M, F)."""
    cols = _as_cols(x, len(rows))
    acc = cols[0] * rows[0]
    for k in range(1, len(rows)):
        acc = acc + cols[k] * rows[k]
    return acc


def _bcast_rows(w, m):
    """Broadcast each row of a (K, F) weight to (m, F) once (hoisted)."""
    return [jnp.broadcast_to(w[k:k + 1, :], (m, w.shape[1])) for k in range(w.shape[0])]


# ----------------------------------------------------------------------------
# Fully fused kernel: encoder time loop + layer loop + horizon rollout.
# ----------------------------------------------------------------------------
def _build_fused_kernel(cfg: Config, T: int, M: int):
    H = cfg.rnn_units
    DA = cfg.input_dim_A
    DAh = cfg.hidden_dim_A
    Din = cfg.input_dim
    LD0 = cfg.lag2 * Din
    nL = cfg.num_layers
    horizon = cfg.horizon
    n_w = len(_WEIGHT_NAMES)
    f32 = jnp.float32

    def kernel(x_ref, xA_ref, *refs):
        out_ref = refs[-1]
        wrefs = refs[:-1]

        # ---- Hoist all weight loads and (1,X)->(M,X) broadcasts once --------
        layers = []
        for i in range(nL):
            vals = dict(zip(_WEIGHT_NAMES, (r[...] for r in wrefs[i * n_w:(i + 1) * n_w])))
            layers.append(dict(
                rR_in=_bcast_rows(vals["WrR_in"], M),
                rR_st=_bcast_rows(vals["WrR_st"], M),
                bR=jnp.broadcast_to(vals["bR"], (M, DAh)),
                rS_in=_bcast_rows(vals["WrS_in"], M),
                rS_st=_bcast_rows(vals["WrS_st"], M),
                bS=jnp.broadcast_to(vals["bS"], (M, DA)),
                rX_zg=_bcast_rows(vals["Wx_zg"], M),
                WR_zg=vals["WR_zg"],
                Wh_zg=vals["Wh_zg"],
                b_zg=jnp.broadcast_to(vals["b_zg"], (M, 2 * H)),
                rX_c=_bcast_rows(vals["Wx_c"], M),
                WR_c=vals["WR_c"],
                Wgh_c=vals["Wgh_c"],
                b_c=jnp.broadcast_to(vals["b_c"], (M, H)),
                wend=jnp.broadcast_to(vals["wend"], (M, H)),
                bend=jnp.broadcast_to(vals["bend"], (M, 1)),
            ))

        # Recurrent state per layer (encoder.init_hidden == zeros); carried as
        # plain values across the fully-unrolled horizon / layer / time loops.
        h = [jnp.zeros((M, H), f32) for _ in range(nL)]
        sA = [jnp.zeros((M, DA), f32) for _ in range(nL)]

        # Layer-0 inputs for horizon step 0 (full-sequence VMEM residents).
        hx = [x_ref[t] for t in range(T)]                       # (M, Din) each
        hxA = []                                                # window as column lists
        for t in range(T):
            xAt = xA_ref[t]                                     # (M, LD0)
            hxA.append([xAt[:, j:j + 1] for j in range(LD0)])

        out_col = 0
        for hz in range(horizon):
            cur_x, cur_xA = hx, hxA
            convs = None
            for i in range(nL):
                lw = layers[i]
                hi, sAi = h[i], sA[i]
                convs, sAs = [], []
                for t in range(len(cur_x)):
                    xt, xAt = cur_x[t], cur_xA[t]

                    # --- RGNCell stand-in (tiny-K VPU, exact-width heads) ----
                    # TODO(synk): exact RGNCell (multi-head GAU) internals were
                    # not provided in the reference source.
                    R = jnp.tanh(_small_dot(xAt, lw["rR_in"])
                                 + _small_dot(sAi, lw["rR_st"]) + lw["bR"])
                    sAi = jnp.tanh(_small_dot(xAt, lw["rS_in"])
                                   + _small_dot(sAi, lw["rS_st"]) + lw["bS"])

                    # --- DASTNCell stand-in (SC == eye folded into weights) --
                    # TODO(synk): exact DASTNCell internals (cheb graph conv,
                    # node/time embeddings, time_index) were not provided; the
                    # time_index argument is therefore unused by this stand-in.
                    zg = jax.nn.sigmoid(
                        _small_dot(xt, lw["rX_zg"])
                        + jnp.dot(R, lw["WR_zg"], preferred_element_type=f32)
                        + jnp.dot(hi, lw["Wh_zg"], preferred_element_type=f32)
                        + lw["b_zg"])                                  # (M, 2H)
                    z = zg[:, :H]
                    g = zg[:, H:]
                    hc = jnp.tanh(
                        _small_dot(xt, lw["rX_c"])
                        + jnp.dot(R, lw["WR_c"], preferred_element_type=f32)
                        + jnp.dot(g * hi, lw["Wgh_c"], preferred_element_type=f32)
                        + lw["b_c"])                                   # (M, H)
                    hi = z * hi + (1.0 - z) * hc

                    # end_conv: Conv2d(1,1,(1,H)) == per-row matvec over H.
                    conv_t = (jnp.sum(hi * lw["wend"], axis=-1, keepdims=True)
                              + lw["bend"])                            # (M, 1)
                    convs.append(conv_t)
                    sAs.append(sAi)

                h[i], sA[i] = hi, sAi
                # Next layer inputs: residual x, previous layer's sA sequence.
                cur_x = [convs[t] + cur_x[t] for t in range(len(cur_x))]
                cur_xA = sAs

            # Output of this horizon step = end_conv sequence of the LAST layer.
            for c in convs:
                out_ref[:, out_col:out_col + 1] = c
                out_col += 1

            # Recirculation (DASTN.forward tail of the while-loop):
            #   source      <- output[:, -1:]
            #   data_local  <- shift(last window, append output)  (length lag2)
            if hz < horizon - 1:
                out_last = convs[-1]                                   # (M, Din)
                new_cols = [out_last[:, j:j + 1] for j in range(Din)]
                hx = [out_last]
                hxA = [hxA[-1][Din:] + new_cols]

    return kernel


# ----------------------------------------------------------------------------
# DASTN.forward — one pallas_call per forward pass.
# ----------------------------------------------------------------------------
def dastn_forward(cfg: Config, params, source, data_local, time_index):
    B, T, N, Din = source.shape
    assert N == cfg.num_nodes and Din == cfg.input_dim
    assert data_local.shape[2] == cfg.lag2
    assert cfg.output_dim == cfg.input_dim == 1, \
        "recirculation/residual/squeeze(1) require output_dim == input_dim == 1"
    M = B * N
    L2 = cfg.lag2
    T_total = T + cfg.horizon - 1
    H, DA, DAh = cfg.rnn_units, cfg.input_dim_A, cfg.hidden_dim_A

    # One-time layout glue (hoisted out of every loop; loops live in-kernel).
    x_seq = jnp.transpose(source, (1, 0, 2, 3)).reshape(T, M, Din).astype(jnp.float32)
    # data_local.permute(0,1,3,2,4): (B,T,L2,N,F) -> (B,T,N,L2,F); flatten once.
    xA_seq = jnp.transpose(data_local, (1, 0, 3, 2, 4)).reshape(T, M, L2 * Din).astype(jnp.float32)
    # TODO(synk): time_index is consumed by the real DASTNCell; its internals
    # are not provided, so it is unused by the stand-in cell.
    del time_index

    weights = [params["layers"][i][k] for i in range(cfg.num_layers) for k in _WEIGHT_NAMES]

    def resident(a):
        nd = a.ndim
        return pl.BlockSpec(a.shape, lambda *_: (0,) * nd)

    in_specs = [resident(x_seq), resident(xA_seq)] + [resident(w) for w in weights]
    out_spec = pl.BlockSpec((M, T_total), lambda *_: (0, 0))

    # Rough advisory cost estimate.
    steps = cfg.num_layers * T_total
    mxu_flops = 2 * M * (DAh * 2 * H + H * 2 * H + DAh * H + H * H)
    vpu_flops = 2 * M * ((L2 * Din + DA) * (DAh + DA) + Din * 3 * H + H) + 12 * M * H
    in_bytes = sum(int(a.size) * a.dtype.itemsize for a in (x_seq, xA_seq, *weights))
    cost = pl.CostEstimate(
        flops=int(steps * (mxu_flops + vpu_flops)),
        transcendentals=int(steps * M * (DAh + DA + 3 * H)),
        bytes_accessed=int(in_bytes + 4 * M * T_total),
    )

    kernel = _build_fused_kernel(cfg, T, M)
    out = pl.pallas_call(
        kernel,
        out_shape=jax.ShapeDtypeStruct((M, T_total), jnp.float32),
        grid_spec=pltpu.PrefetchScalarGridSpec(
            num_scalar_prefetch=0,
            grid=(1,),
            in_specs=in_specs,
            out_specs=out_spec,
        ),
        compiler_params=pltpu.CompilerParams(
            dimension_semantics=("arbitrary",),
        ),
        cost_estimate=cost,
    )(x_seq, xA_seq, *weights)

    # (M, T_total) -> (B, T_total, N, output_dim)
    return out.reshape(B, N, T_total).transpose(0, 2, 1)[..., None]


# ----------------------------------------------------------------------------
# Deterministic parameter init (shapes implied by AVWDCRNN.__init__)
# ----------------------------------------------------------------------------
def init_params(cfg: Config, key):
    H, DA, DAh, Din = cfg.rnn_units, cfg.input_dim_A, cfg.hidden_dim_A, cfg.input_dim

    def make_layer(layer_idx, lkey):
        LD = cfg.lag2 * Din if layer_idx == 0 else DA
        idx = [0]

        def w(shape):
            idx[0] += 1
            return 0.1 * jax.random.normal(
                jax.random.fold_in(lkey, idx[0]), shape, jnp.float32)

        return {
            # RGNCell stand-in: separate exact-width readout / state heads.
            "WrR_in": w((LD, DAh)),
            "WrR_st": w((DA, DAh)),
            "bR":     w((1, DAh)),
            "WrS_in": w((LD, DA)),
            "WrS_st": w((DA, DA)),
            "bS":     w((1, DA)),
            # DASTNCell stand-in: z|g gates share one exact (M, 2H) result.
            "Wx_zg":  w((Din, 2 * H)),
            "WR_zg":  w((DAh, 2 * H)),
            "Wh_zg":  w((H, 2 * H)),
            "b_zg":   w((1, 2 * H)),
            # candidate gate (contracts g*h), exact (M, H).
            "Wx_c":   w((Din, H)),
            "WR_c":   w((DAh, H)),
            "Wgh_c":  w((H, H)),
            "b_c":    w((1, H)),
            # end_conv: Conv2d(1, 1, (1, H)) weight row + bias.
            "wend":   w((1, H)),
            "bend":   w((1, 1)),
        }

    lkeys = jax.random.split(key, cfg.num_layers)
    return {"layers": [make_layer(i, lkeys[i]) for i in range(cfg.num_layers)]}


# ----------------------------------------------------------------------------
if __name__ == "__main__":
    cfg = Config()
    B = 2
    key = jax.random.PRNGKey(0)
    k_src, k_loc, k_par = jax.random.split(key, 3)

    source = jax.random.normal(
        k_src, (B, cfg.lag, cfg.num_nodes, cfg.input_dim), jnp.float32)
    data_local = jax.random.normal(
        k_loc, (B, cfg.lag, cfg.lag2, cfg.num_nodes, cfg.input_dim), jnp.float32)
    time_index = jnp.tile(
        jnp.arange(cfg.lag, dtype=jnp.float32)[None, :], (B, 1))

    params = init_params(cfg, k_par)

    fwd = jax.jit(functools.partial(dastn_forward, cfg))
    out = jax.block_until_ready(fwd(params, source, data_local, time_index))
    assert out.shape == (B, cfg.lag + cfg.horizon - 1, cfg.num_nodes, cfg.output_dim), out.shape
    assert bool(jnp.all(jnp.isfinite(out)))
    print("KERNEL_OK")
</pallas_src>

<mosaic_0001>
module attributes {stable_mosaic.version = 11 : i64} {
  func.func @kernel(%arg0: i32, %arg1: memref<4x16x1xf32, #tpu.memory_space<vmem>>, %arg2: memref<4x16x3xf32, #tpu.memory_space<vmem>>, %arg3: memref<3x16xf32, #tpu.memory_space<vmem>>, %arg4: memref<4x16xf32, #tpu.memory_space<vmem>>, %arg5: memref<1x16xf32, #tpu.memory_space<vmem>>, %arg6: memref<3x4xf32, #tpu.memory_space<vmem>>, %arg7: memref<4x4xf32, #tpu.memory_space<vmem>>, %arg8: memref<1x4xf32, #tpu.memory_space<vmem>>, %arg9: memref<1x64xf32, #tpu.memory_space<vmem>>, %arg10: memref<16x64xf32, #tpu.memory_space<vmem>>, %arg11: memref<32x64xf32, #tpu.memory_space<vmem>>, %arg12: memref<1x64xf32, #tpu.memory_space<vmem>>, %arg13: memref<1x32xf32, #tpu.memory_space<vmem>>, %arg14: memref<16x32xf32, #tpu.memory_space<vmem>>, %arg15: memref<32x32xf32, #tpu.memory_space<vmem>>, %arg16: memref<1x32xf32, #tpu.memory_space<vmem>>, %arg17: memref<1x32xf32, #tpu.memory_space<vmem>>, %arg18: memref<1x1xf32, #tpu.memory_space<vmem>>, %arg19: memref<16x5xf32, #tpu.memory_space<vmem>>) attributes {dimension_semantics = [#tpu.dimension_semantics<arbitrary>], iteration_bounds = array<i64: 1>, scalar_prefetch = 0 : i64, scratch_operands = 0 : i64, tpu.core_type = #tpu.core_type<tc>, window_params = [{pipeline_mode = #tpu.pipeline_mode<synchronous>, transform_indices = @transform_0, window_bounds = array<i64: 4, 16, 1>}, {pipeline_mode = #tpu.pipeline_mode<synchronous>, transform_indices = @transform_1, window_bounds = array<i64: 4, 16, 3>}, {pipeline_mode = #tpu.pipeline_mode<synchronous>, transform_indices = @transform_2, window_bounds = array<i64: 3, 16>}, {pipeline_mode = #tpu.pipeline_mode<synchronous>, transform_indices = @transform_3, window_bounds = array<i64: 4, 16>}, {pipeline_mode = #tpu.pipeline_mode<synchronous>, transform_indices = @transform_4, window_bounds = array<i64: 1, 16>}, {pipeline_mode = #tpu.pipeline_mode<synchronous>, transform_indices = @transform_5, window_bounds = array<i64: 3, 4>}, {pipeline_mode = #tpu.pipeline_mode<synchronous>, transform_indices = @transform_6, window_bounds = array<i64: 4, 4>}, {pipeline_mode = #tpu.pipeline_mode<synchronous>, transform_indices = @transform_7, window_bounds = array<i64: 1, 4>}, {pipeline_mode = #tpu.pipeline_mode<synchronous>, transform_indices = @transform_8, window_bounds = array<i64: 1, 64>}, {pipeline_mode = #tpu.pipeline_mode<synchronous>, transform_indices = @transform_9, window_bounds = array<i64: 16, 64>}, {pipeline_mode = #tpu.pipeline_mode<synchronous>, transform_indices = @transform_10, window_bounds = array<i64: 32, 64>}, {pipeline_mode = #tpu.pipeline_mode<synchronous>, transform_indices = @transform_11, window_bounds = array<i64: 1, 64>}, {pipeline_mode = #tpu.pipeline_mode<synchronous>, transform_indices = @transform_12, window_bounds = array<i64: 1, 32>}, {pipeline_mode = #tpu.pipeline_mode<synchronous>, transform_indices = @transform_13, window_bounds = array<i64: 16, 32>}, {pipeline_mode = #tpu.pipeline_mode<synchronous>, transform_indices = @transform_14, window_bounds = array<i64: 32, 32>}, {pipeline_mode = #tpu.pipeline_mode<synchronous>, transform_indices = @transform_15, window_bounds = array<i64: 1, 32>}, {pipeline_mode = #tpu.pipeline_mode<synchronous>, transform_indices = @transform_16, window_bounds = array<i64: 1, 32>}, {pipeline_mode = #tpu.pipeline_mode<synchronous>, transform_indices = @transform_17, window_bounds = array<i64: 1, 1>}, {pipeline_mode = #tpu.pipeline_mode<synchronous>, transform_indices = @transform_18, window_bounds = array<i64: 16, 5>}]} {
    %c0 = arith.constant 0 : index
    %c0_0 = arith.constant 0 : index
    %0 = vector.load %arg3[%c0, %c0_0] : memref<3x16xf32, #tpu.memory_space<vmem>>, vector<3x16xf32>
    %c0_1 = arith.constant 0 : index
    %c0_2 = arith.constant 0 : index
    %1 = vector.load %arg4[%c0_1, %c0_2] : memref<4x16xf32, #tpu.memory_space<vmem>>, vector<4x16xf32>
    %c0_3 = arith.constant 0 : index
    %c0_4 = arith.constant 0 : index
    %2 = vector.load %arg5[%c0_3, %c0_4] : memref<1x16xf32, #tpu.memory_space<vmem>>, vector<1x16xf32>
    %c0_5 = arith.constant 0 : index
    %c0_6 = arith.constant 0 : index
    %3 = vector.load %arg6[%c0_5, %c0_6] : memref<3x4xf32, #tpu.memory_space<vmem>>, vector<3x4xf32>
    %c0_7 = arith.constant 0 : index
    %c0_8 = arith.constant 0 : index
    %4 = vector.load %arg7[%c0_7, %c0_8] : memref<4x4xf32, #tpu.memory_space<vmem>>, vector<4x4xf32>
    %c0_9 = arith.constant 0 : index
    %c0_10 = arith.constant 0 : index
    %5 = vector.load %arg8[%c0_9, %c0_10] : memref<1x4xf32, #tpu.memory_space<vmem>>, vector<1x4xf32>
    %c0_11 = arith.constant 0 : index
    %c0_12 = arith.constant 0 : index
    %6 = vector.load %arg9[%c0_11, %c0_12] : memref<1x64xf32, #tpu.memory_space<vmem>>, vector<1x64xf32>
    %c0_13 = arith.constant 0 : index
    %c0_14 = arith.constant 0 : index
    %7 = vector.load %arg10[%c0_13, %c0_14] : memref<16x64xf32, #tpu.memory_space<vmem>>, vector<16x64xf32>
    %c0_15 = arith.constant 0 : index
    %c0_16 = arith.constant 0 : index
    %8 = vector.load %arg11[%c0_15, %c0_16] : memref<32x64xf32, #tpu.memory_space<vmem>>, vector<32x64xf32>
    %c0_17 = arith.constant 0 : index
    %c0_18 = arith.constant 0 : index
    %9 = vector.load %arg12[%c0_17, %c0_18] : memref<1x64xf32, #tpu.memory_space<vmem>>, vector<1x64xf32>
    %c0_19 = arith.constant 0 : index
    %c0_20 = arith.constant 0 : index
    %10 = vector.load %arg13[%c0_19, %c0_20] : memref<1x32xf32, #tpu.memory_space<vmem>>, vector<1x32xf32>
    %c0_21 = arith.constant 0 : index
    %c0_22 = arith.constant 0 : index
    %11 = vector.load %arg14[%c0_21, %c0_22] : memref<16x32xf32, #tpu.memory_space<vmem>>, vector<16x32xf32>
    %c0_23 = arith.constant 0 : index
    %c0_24 = arith.constant 0 : index
    %12 = vector.load %arg15[%c0_23, %c0_24] : memref<32x32xf32, #tpu.memory_space<vmem>>, vector<32x32xf32>
    %c0_25 = arith.constant 0 : index
    %c0_26 = arith.constant 0 : index
    %13 = vector.load %arg16[%c0_25, %c0_26] : memref<1x32xf32, #tpu.memory_space<vmem>>, vector<1x32xf32>
    %c0_27 = arith.constant 0 : index
    %c0_28 = arith.constant 0 : index
    %14 = vector.load %arg17[%c0_27, %c0_28] : memref<1x32xf32, #tpu.memory_space<vmem>>, vector<1x32xf32>
    %c0_29 = arith.constant 0 : index
    %c0_30 = arith.constant 0 : index
    %15 = vector.load %arg18[%c0_29, %c0_30] : memref<1x1xf32, #tpu.memory_space<vmem>>, vector<1x1xf32>
    %16 = vector.extract_strided_slice %0 {offsets = [0, 0], sizes = [1, 16], strides = [1, 1]} : vector<3x16xf32> to vector<1x16xf32>
    %17 = vector.shape_cast %16 : vector<1x16xf32> to vector<1x16xf32>
    %18 = vector.broadcast %17 : vector<1x16xf32> to vector<16x16xf32>
    %19 = vector.extract_strided_slice %0 {offsets = [1, 0], sizes = [1, 16], strides = [1, 1]} : vector<3x16xf32> to vector<1x16xf32>
    %20 = vector.shape_cast %19 : vector<1x16xf32> to vector<1x16xf32>
    %21 = vector.broadcast %20 : vector<1x16xf32> to vector<16x16xf32>
    %22 = vector.extract_strided_slice %0 {offsets = [2, 0], sizes = [1, 16], strides = [1, 1]} : vector<3x16xf32> to vector<1x16xf32>
    %23 = vector.shape_cast %22 : vector<1x16xf32> to vector<1x16xf32>
    %24 = vector.broadcast %23 : vector<1x16xf32> to vector<16x16xf32>
    %25 = vector.extract_strided_slice %1 {offsets = [0, 0], sizes = [1, 16], strides = [1, 1]} : vector<4x16xf32> to vector<1x16xf32>
    %26 = vector.shape_cast %25 : vector<1x16xf32> to vector<1x16xf32>
    %27 = vector.broadcast %26 : vector<1x16xf32> to vector<16x16xf32>
    %28 = vector.extract_strided_slice %1 {offsets = [1, 0], sizes = [1, 16], strides = [1, 1]} : vector<4x16xf32> to vector<1x16xf32>
    %29 = vector.shape_cast %28 : vector<1x16xf32> to vector<1x16xf32>
    %30 = vector.broadcast %29 : vector<1x16xf32> to vector<16x16xf32>
    %31 = vector.extract_strided_slice %1 {offsets = [2, 0], sizes = [1, 16], strides = [1, 1]} : vector<4x16xf32> to vector<1x16xf32>
    %32 = vector.shape_cast %31 : vector<1x16xf32> to vector<1x16xf32>
    %33 = vector.broadcast %32 : vector<1x16xf32> to vector<16x16xf32>
    %34 = vector.extract_strided_slice %1 {offsets = [3, 0], sizes = [1, 16], strides = [1, 1]} : vector<4x16xf32> to vector<1x16xf32>
    %35 = vector.shape_cast %34 : vector<1x16xf32> to vector<1x16xf32>
    %36 = vector.broadcast %35 : vector<1x16xf32> to vector<16x16xf32>
    %37 = vector.shape_cast %2 : vector<1x16xf32> to vector<1x16xf32>
    %38 = vector.broadcast %37 : vector<1x16xf32> to vector<16x16xf32>
    %39 = vector.extract_strided_slice %3 {offsets = [0, 0], sizes = [1, 4], strides = [1, 1]} : vector<3x4xf32> to vector<1x4xf32>
    %40 = vector.shape_cast %39 : vector<1x4xf32> to vector<1x4xf32>
    %41 = vector.broadcast %40 : vector<1x4xf32> to vector<16x4xf32>
    %42 = vector.extract_strided_slice %3 {offsets = [1, 0], sizes = [1, 4], strides = [1, 1]} : vector<3x4xf32> to vector<1x4xf32>
    %43 = vector.shape_cast %42 : vector<1x4xf32> to vector<1x4xf32>
    %44 = vector.broadcast %43 : vector<1x4xf32> to vector<16x4xf32>
    %45 = vector.extract_strided_slice %3 {offsets = [2, 0], sizes = [1, 4], strides = [1, 1]} : vector<3x4xf32> to vector<1x4xf32>
    %46 = vector.shape_cast %45 : vector<1x4xf32> to vector<1x4xf32>
    %47 = vector.broadcast %46 : vector<1x4xf32> to vector<16x4xf32>
    %48 = vector.extract_strided_slice %4 {offsets = [0, 0], sizes = [1, 4], strides = [1, 1]} : vector<4x4xf32> to vector<1x4xf32>
    %49 = vector.shape_cast %48 : vector<1x4xf32> to vector<1x4xf32>
    %50 = vector.broadcast %49 : vector<1x4xf32> to vector<16x4xf32>
    %51 = vector.extract_strided_slice %4 {offsets = [1, 0], sizes = [1, 4], strides = [1, 1]} : vector<4x4xf32> to vector<1x4xf32>
    %52 = vector.shape_cast %51 : vector<1x4xf32> to vector<1x4xf32>
    %53 = vector.broadcast %52 : vector<1x4xf32> to vector<16x4xf32>
    %54 = vector.extract_strided_slice %4 {offsets = [2, 0], sizes = [1, 4], strides = [1, 1]} : vector<4x4xf32> to vector<1x4xf32>
    %55 = vector.shape_cast %54 : vector<1x4xf32> to vector<1x4xf32>
    %56 = vector.broadcast %55 : vector<1x4xf32> to vector<16x4xf32>
    %57 = vector.extract_strided_slice %4 {offsets = [3, 0], sizes = [1, 4], strides = [1, 1]} : vector<4x4xf32> to vector<1x4xf32>
    %58 = vector.shape_cast %57 : vector<1x4xf32> to vector<1x4xf32>
    %59 = vector.broadcast %58 : vector<1x4xf32> to vector<16x4xf32>
    %60 = vector.shape_cast %5 : vector<1x4xf32> to vector<1x4xf32>
    %61 = vector.broadcast %60 : vector<1x4xf32> to vector<16x4xf32>
    %62 = vector.shape_cast %6 : vector<1x64xf32> to vector<1x64xf32>
    %63 = vector.broadcast %62 : vector<1x64xf32> to vector<16x64xf32>
    %64 = vector.shape_cast %9 : vector<1x64xf32> to vector<1x64xf32>
    %65 = vector.broadcast %64 : vector<1x64xf32> to vector<16x64xf32>
    %66 = vector.shape_cast %10 : vector<1x32xf32> to vector<1x32xf32>
    %67 = vector.broadcast %66 : vector<1x32xf32> to vector<16x32xf32>
    %68 = vector.shape_cast %13 : vector<1x32xf32> to vector<1x32xf32>
    %69 = vector.broadcast %68 : vector<1x32xf32> to vector<16x32xf32>
    %70 = vector.shape_cast %14 : vector<1x32xf32> to vector<1x32xf32>
    %71 = vector.broadcast %70 : vector<1x32xf32> to vector<16x32xf32>
    %72 = vector.shape_cast %15 : vector<1x1xf32> to vector<1x1xf32>
    %73 = vector.broadcast %72 : vector<1x1xf32> to vector<16x1xf32>
    %cst = arith.constant 0.000000e+00 : f32
    %74 = vector.broadcast %cst : f32 to vector<16x32xf32>
    %cst_31 = arith.constant 0.000000e+00 : f32
    %75 = vector.broadcast %cst_31 : f32 to vector<16x4xf32>
    %c0_32 = arith.constant 0 : index
    %c0_33 = arith.constant 0 : index
    %c0_34 = arith.constant 0 : index
    %76 = vector.load %arg1[%c0_32, %c0_33, %c0_34] : memref<4x16x1xf32, #tpu.memory_space<vmem>>, vector<1x16x1xf32>
    %77 = vector.shape_cast %76 : vector<1x16x1xf32> to vector<16x1xf32>
    %c1 = arith.constant 1 : index
    %c0_35 = arith.constant 0 : index
    %c0_36 = arith.constant 0 : index
    %78 = vector.load %arg1[%c1, %c0_35, %c0_36] : memref<4x16x1xf32, #tpu.memory_space<vmem>>, vector<1x16x1xf32>
    %79 = vector.shape_cast %78 : vector<1x16x1xf32> to vector<16x1xf32>
    %c2 = arith.constant 2 : index
    %c0_37 = arith.constant 0 : index
    %c0_38 = arith.constant 0 : index
    %80 = vector.load %arg1[%c2, %c0_37, %c0_38] : memref<4x16x1xf32, #tpu.memory_space<vmem>>, vector<1x16x1xf32>
    %81 = vector.shape_cast %80 : vector<1x16x1xf32> to vector<16x1xf32>
    %c3 = arith.constant 3 : index
    %c0_39 = arith.constant 0 : index
    %c0_40 = arith.constant 0 : index
    %82 = vector.load %arg1[%c3, %c0_39, %c0_40] : memref<4x16x1xf32, #tpu.memory_space<vmem>>, vector<1x16x1xf32>
    %83 = vector.shape_cast %82 : vector<1x16x1xf32> to vector<16x1xf32>
    %c0_41 = arith.constant 0 : index
    %c0_42 = arith.constant 0 : index
    %c0_43 = arith.constant 0 : index
    %84 = vector.load %arg2[%c0_41, %c0_42, %c0_43] : memref<4x16x3xf32, #tpu.memory_space<vmem>>, vector<1x16x3xf32>
    %85 = vector.shape_cast %84 : vector<1x16x3xf32> to vector<16x3xf32>
    %86 = vector.extract_strided_slice %85 {offsets = [0, 0], sizes = [16, 1], strides = [1, 1]} : vector<16x3xf32> to vector<16x1xf32>
    %87 = vector.extract_strided_slice %85 {offsets = [0, 1], sizes = [16, 1], strides = [1, 1]} : vector<16x3xf32> to vector<16x1xf32>
    %88 = vector.extract_strided_slice %85 {offsets = [0, 2], sizes = [16, 1], strides = [1, 1]} : vector<16x3xf32> to vector<16x1xf32>
    %c1_44 = arith.constant 1 : index
    %c0_45 = arith.constant 0 : index
    %c0_46 = arith.constant 0 : index
    %89 = vector.load %arg2[%c1_44, %c0_45, %c0_46] : memref<4x16x3xf32, #tpu.memory_space<vmem>>, vector<1x16x3xf32>
    %90 = vector.shape_cast %89 : vector<1x16x3xf32> to vector<16x3xf32>
    %91 = vector.extract_strided_slice %90 {offsets = [0, 0], sizes = [16, 1], strides = [1, 1]} : vector<16x3xf32> to vector<16x1xf32>
    %92 = vector.extract_strided_slice %90 {offsets = [0, 1], sizes = [16, 1], strides = [1, 1]} : vector<16x3xf32> to vector<16x1xf32>
    %93 = vector.extract_strided_slice %90 {offsets = [0, 2], sizes = [16, 1], strides = [1, 1]} : vector<16x3xf32> to vector<16x1xf32>
    %c2_47 = arith.constant 2 : index
    %c0_48 = arith.constant 0 : index
    %c0_49 = arith.constant 0 : index
    %94 = vector.load %arg2[%c2_47, %c0_48, %c0_49] : memref<4x16x3xf32, #tpu.memory_space<vmem>>, vector<1x16x3xf32>
    %95 = vector.shape_cast %94 : vector<1x16x3xf32> to vector<16x3xf32>
    %96 = vector.extract_strided_slice %95 {offsets = [0, 0], sizes = [16, 1], strides = [1, 1]} : vector<16x3xf32> to vector<16x1xf32>
    %97 = vector.extract_strided_slice %95 {offsets = [0, 1], sizes = [16, 1], strides = [1, 1]} : vector<16x3xf32> to vector<16x1xf32>
    %98 = vector.extract_strided_slice %95 {offsets = [0, 2], sizes = [16, 1], strides = [1, 1]} : vector<16x3xf32> to vector<16x1xf32>
    %c3_50 = arith.constant 3 : index
    %c0_51 = arith.constant 0 : index
    %c0_52 = arith.constant 0 : index
    %99 = vector.load %arg2[%c3_50, %c0_51, %c0_52] : memref<4x16x3xf32, #tpu.memory_space<vmem>>, vector<1x16x3xf32>
    %100 = vector.shape_cast %99 : vector<1x16x3xf32> to vector<16x3xf32>
    %101 = vector.extract_strided_slice %100 {offsets = [0, 0], sizes = [16, 1], strides = [1, 1]} : vector<16x3xf32> to vector<16x1xf32>
    %102 = vector.extract_strided_slice %100 {offsets = [0, 1], sizes = [16, 1], strides = [1, 1]} : vector<16x3xf32> to vector<16x1xf32>
    %103 = vector.extract_strided_slice %100 {offsets = [0, 2], sizes = [16, 1], strides = [1, 1]} : vector<16x3xf32> to vector<16x1xf32>
    %104 = vector.broadcast %86 : vector<16x1xf32> to vector<16x16xf32>
    %105 = arith.mulf %104, %18 : vector<16x16xf32>
    %106 = vector.broadcast %87 : vector<16x1xf32> to vector<16x16xf32>
    %107 = arith.mulf %106, %21 : vector<16x16xf32>
    %108 = arith.addf %105, %107 : vector<16x16xf32>
    %109 = vector.broadcast %88 : vector<16x1xf32> to vector<16x16xf32>
    %110 = arith.mulf %109, %24 : vector<16x16xf32>
    %111 = arith.addf %108, %110 : vector<16x16xf32>
    %112 = vector.extract_strided_slice %75 {offsets = [0, 0], sizes = [16, 1], strides = [1, 1]} : vector<16x4xf32> to vector<16x1xf32>
    %113 = vector.extract_strided_slice %75 {offsets = [0, 1], sizes = [16, 1], strides = [1, 1]} : vector<16x4xf32> to vector<16x1xf32>
    %114 = vector.extract_strided_slice %75 {offsets = [0, 2], sizes = [16, 1], strides = [1, 1]} : vector<16x4xf32> to vector<16x1xf32>
    %115 = vector.extract_strided_slice %75 {offsets = [0, 3], sizes = [16, 1], strides = [1, 1]} : vector<16x4xf32> to vector<16x1xf32>
    %116 = vector.broadcast %112 : vector<16x1xf32> to vector<16x16xf32>
    %117 = arith.mulf %116, %27 : vector<16x16xf32>
    %118 = vector.broadcast %113 : vector<16x1xf32> to vector<16x16xf32>
    %119 = arith.mulf %118, %30 : vector<16x16xf32>
    %120 = arith.addf %117, %119 : vector<16x16xf32>
    %121 = vector.broadcast %114 : vector<16x1xf32> to vector<16x16xf32>
    %122 = arith.mulf %121, %33 : vector<16x16xf32>
    %123 = arith.addf %120, %122 : vector<16x16xf32>
    %124 = vector.broadcast %115 : vector<16x1xf32> to vector<16x16xf32>
    %125 = arith.mulf %124, %36 : vector<16x16xf32>
    %126 = arith.addf %123, %125 : vector<16x16xf32>
    %127 = arith.addf %111, %126 : vector<16x16xf32>
    %128 = arith.addf %127, %38 : vector<16x16xf32>
    %129 = math.tanh %128 : vector<16x16xf32>
    %130 = vector.broadcast %86 : vector<16x1xf32> to vector<16x4xf32>
    %131 = arith.mulf %130, %41 : vector<16x4xf32>
    %132 = vector.broadcast %87 : vector<16x1xf32> to vector<16x4xf32>
    %133 = arith.mulf %132, %44 : vector<16x4xf32>
    %134 = arith.addf %131, %133 : vector<16x4xf32>
    %135 = vector.broadcast %88 : vector<16x1xf32> to vector<16x4xf32>
    %136 = arith.mulf %135, %47 : vector<16x4xf32>
    %137 = arith.addf %134, %136 : vector<16x4xf32>
    %138 = vector.extract_strided_slice %75 {offsets = [0, 0], sizes = [16, 1], strides = [1, 1]} : vector<16x4xf32> to vector<16x1xf32>
    %139 = vector.extract_strided_slice %75 {offsets = [0, 1], sizes = [16, 1], strides = [1, 1]} : vector<16x4xf32> to vector<16x1xf32>
    %140 = vector.extract_strided_slice %75 {offsets = [0, 2], sizes = [16, 1], strides = [1, 1]} : vector<16x4xf32> to vector<16x1xf32>
    %141 = vector.extract_strided_slice %75 {offsets = [0, 3], sizes = [16, 1], strides = [1, 1]} : vector<16x4xf32> to vector<16x1xf32>
    %142 = vector.broadcast %138 : vector<16x1xf32> to vector<16x4xf32>
    %143 = arith.mulf %142, %50 : vector<16x4xf32>
    %144 = vector.broadcast %139 : vector<16x1xf32> to vector<16x4xf32>
    %145 = arith.mulf %144, %53 : vector<16x4xf32>
    %146 = arith.addf %143, %145 : vector<16x4xf32>
    %147 = vector.broadcast %140 : vector<16x1xf32> to vector<16x4xf32>
    %148 = arith.mulf %147, %56 : vector<16x4xf32>
    %149 = arith.addf %146, %148 : vector<16x4xf32>
    %150 = vector.broadcast %141 : vector<16x1xf32> to vector<16x4xf32>
    %151 = arith.mulf %150, %59 : vector<16x4xf32>
    %152 = arith.addf %149, %151 : vector<16x4xf32>
    %153 = arith.addf %137, %152 : vector<16x4xf32>
    %154 = arith.addf %153, %61 : vector<16x4xf32>
    %155 = math.tanh %154 : vector<16x4xf32>
    %156 = vector.broadcast %77 : vector<16x1xf32> to vector<16x64xf32>
    %157 = arith.mulf %156, %63 : vector<16x64xf32>
    %cst_53 = arith.constant dense<0.000000e+00> : vector<16x64xf32>
    %158 = tpu.matmul %129, %7, %cst_53 {dimension_numbers = #tpu.dot_dimension_numbers<[1], [0], [0], [1], [0, 0, 1, 1], [], []>} : vector<16x16xf32>, vector<16x64xf32>, vector<16x64xf32> -> vector<16x64xf32>
    %159 = arith.addf %157, %158 : vector<16x64xf32>
    %cst_54 = arith.constant dense<0.000000e+00> : vector<16x64xf32>
    %160 = tpu.matmul %74, %8, %cst_54 {dimension_numbers = #tpu.dot_dimension_numbers<[1], [0], [0], [1], [0, 0, 1, 1], [], []>} : vector<16x32xf32>, vector<32x64xf32>, vector<16x64xf32> -> vector<16x64xf32>
    %161 = arith.addf %159, %160 : vector<16x64xf32>
    %162 = arith.addf %161, %65 : vector<16x64xf32>
    %163 = arith.negf %162 : vector<16x64xf32>
    %164 = math.exp %163 : vector<16x64xf32>
    %cst_55 = arith.constant 1.000000e+00 : f32
    %165 = vector.broadcast %cst_55 : f32 to vector<16x64xf32>
    %166 = arith.addf %165, %164 : vector<16x64xf32>
    %167 = arith.divf %165, %166 : vector<16x64xf32>
    %168 = vector.extract_strided_slice %167 {offsets = [0, 0], sizes = [16, 32], strides = [1, 1]} : vector<16x64xf32> to vector<16x32xf32>
    %169 = vector.extract_strided_slice %167 {offsets = [0, 32], sizes = [16, 32], strides = [1, 1]} : vector<16x64xf32> to vector<16x32xf32>
    %170 = vector.broadcast %77 : vector<16x1xf32> to vector<16x32xf32>
    %171 = arith.mulf %170, %67 : vector<16x32xf32>
    %cst_56 = arith.constant dense<0.000000e+00> : vector<16x32xf32>
    %172 = tpu.matmul %129, %11, %cst_56 {dimension_numbers = #tpu.dot_dimension_numbers<[1], [0], [0], [1], [0, 0, 1, 1], [], []>} : vector<16x16xf32>, vector<16x32xf32>, vector<16x32xf32> -> vector<16x32xf32>
    %173 = arith.addf %171, %172 : vector<16x32xf32>
    %174 = arith.mulf %169, %74 : vector<16x32xf32>
    %cst_57 = arith.constant dense<0.000000e+00> : vector<16x32xf32>
    %175 = tpu.matmul %174, %12, %cst_57 {dimension_numbers = #tpu.dot_dimension_numbers<[1], [0], [0], [1], [0, 0, 1, 1], [], []>} : vector<16x32xf32>, vector<32x32xf32>, vector<16x32xf32> -> vector<16x32xf32>
    %176 = arith.addf %173, %175 : vector<16x32xf32>
    %177 = arith.addf %176, %69 : vector<16x32xf32>
    %178 = math.tanh %177 : vector<16x32xf32>
    %179 = arith.mulf %168, %74 : vector<16x32xf32>
    %cst_58 = arith.constant 1.000000e+00 : f32
    %180 = vector.broadcast %cst_58 : f32 to vector<16x32xf32>
    %181 = arith.subf %180, %168 : vector<16x32xf32>
    %182 = arith.mulf %181, %178 : vector<16x32xf32>
    %183 = arith.addf %179, %182 : vector<16x32xf32>
    %184 = arith.mulf %183, %71 : vector<16x32xf32>
    %cst_59 = arith.constant dense<0.000000e+00> : vector<16xf32>
    %185 = vector.multi_reduction <add>, %184, %cst_59 [1] : vector<16x32xf32> to vector<16xf32>
    %186 = vector.shape_cast %185 : vector<16xf32> to vector<16x1xf32>
    %187 = arith.addf %186, %73 : vector<16x1xf32>
    %188 = vector.broadcast %91 : vector<16x1xf32> to vector<16x16xf32>
    %189 = arith.mulf %188, %18 : vector<16x16xf32>
    %190 = vector.broadcast %92 : vector<16x1xf32> to vector<16x16xf32>
    %191 = arith.mulf %190, %21 : vector<16x16xf32>
    %192 = arith.addf %189, %191 : vector<16x16xf32>
    %193 = vector.broadcast %93 : vector<16x1xf32> to vector<16x16xf32>
    %194 = arith.mulf %193, %24 : vector<16x16xf32>
    %195 = arith.addf %192, %194 : vector<16x16xf32>
    %196 = vector.extract_strided_slice %155 {offsets = [0, 0], sizes = [16, 1], strides = [1, 1]} : vector<16x4xf32> to vector<16x1xf32>
    %197 = vector.extract_strided_slice %155 {offsets = [0, 1], sizes = [16, 1], strides = [1, 1]} : vector<16x4xf32> to vector<16x1xf32>
    %198 = vector.extract_strided_slice %155 {offsets = [0, 2], sizes = [16, 1], strides = [1, 1]} : vector<16x4xf32> to vector<16x1xf32>
    %199 = vector.extract_strided_slice %155 {offsets = [0, 3], sizes = [16, 1], strides = [1, 1]} : vector<16x4xf32> to vector<16x1xf32>
    %200 = vector.broadcast %196 : vector<16x1xf32> to vector<16x16xf32>
    %201 = arith.mulf %200, %27 : vector<16x16xf32>
    %202 = vector.broadcast %197 : vector<16x1xf32> to vector<16x16xf32>
    %203 = arith.mulf %202, %30 : vector<16x16xf32>
    %204 = arith.addf %201, %203 : vector<16x16xf32>
    %205 = vector.broadcast %198 : vector<16x1xf32> to vector<16x16xf32>
    %206 = arith.mulf %205, %33 : vector<16x16xf32>
    %207 = arith.addf %204, %206 : vector<16x16xf32>
    %208 = vector.broadcast %199 : vector<16x1xf32> to vector<16x16xf32>
    %209 = arith.mulf %208, %36 : vector<16x16xf32>
    %210 = arith.addf %207, %209 : vector<16x16xf32>
    %211 = arith.addf %195, %210 : vector<16x16xf32>
    %212 = arith.addf %211, %38 : vector<16x16xf32>
    %213 = math.tanh %212 : vector<16x16xf32>
    %214 = vector.broadcast %91 : vector<16x1xf32> to vector<16x4xf32>
    %215 = arith.mulf %214, %41 : vector<16x4xf32>
    %216 = vector.broadcast %92 : vector<16x1xf32> to vector<16x4xf32>
    %217 = arith.mulf %216, %44 : vector<16x4xf32>
    %218 = arith.addf %215, %217 : vector<16x4xf32>
    %219 = vector.broadcast %93 : vector<16x1xf32> to vector<16x4xf32>
    %220 = arith.mulf %219, %47 : vector<16x4xf32>
    %221 = arith.addf %218, %220 : vector<16x4xf32>
    %222 = vector.extract_strided_slice %155 {offsets = [0, 0], sizes = [16, 1], strides = [1, 1]} : vector<16x4xf32> to vector<16x1xf32>
    %223 = vector.extract_strided_slice %155 {offsets = [0, 1], sizes = [16, 1], strides = [1, 1]} : vector<16x4xf32> to vector<16x1xf32>
    %224 = vector.extract_strided_slice %155 {offsets = [0, 2], sizes = [16, 1], strides = [1, 1]} : vector<16x4xf32> to vector<16x1xf32>
    %225 = vector.extract_strided_slice %155 {offsets = [0, 3], sizes = [16, 1], strides = [1, 1]} : vector<16x4xf32> to vector<16x1xf32>
    %226 = vector.broadcast %222 : vector<16x1xf32> to vector<16x4xf32>
    %227 = arith.mulf %226, %50 : vector<16x4xf32>
    %228 = vector.broadcast %223 : vector<16x1xf32> to vector<16x4xf32>
    %229 = arith.mulf %228, %53 : vector<16x4xf32>
    %230 = arith.addf %227, %229 : vector<16x4xf32>
    %231 = vector.broadcast %224 : vector<16x1xf32> to vector<16x4xf32>
    %232 = arith.mulf %231, %56 : vector<16x4xf32>
    %233 = arith.addf %230, %232 : vector<16x4xf32>
    %234 = vector.broadcast %225 : vector<16x1xf32> to vector<16x4xf32>
    %235 = arith.mulf %234, %59 : vector<16x4xf32>
    %236 = arith.addf %233, %235 : vector<16x4xf32>
    %237 = arith.addf %221, %236 : vector<16x4xf32>
    %238 = arith.addf %237, %61 : vector<16x4xf32>
    %239 = math.tanh %238 : vector<16x4xf32>
    %240 = vector.broadcast %79 : vector<16x1xf32> to vector<16x64xf32>
    %241 = arith.mulf %240, %63 : vector<16x64xf32>
    %cst_60 = arith.constant dense<0.000000e+00> : vector<16x64xf32>
    %242 = tpu.matmul %213, %7, %cst_60 {dimension_numbers = #tpu.dot_dimension_numbers<[1], [0], [0], [1], [0, 0, 1, 1], [], []>} : vector<16x16xf32>, vector<16x64xf32>, vector<16x64xf32> -> vector<16x64xf32>
    %243 = arith.addf %241, %242 : vector<16x64xf32>
    %cst_61 = arith.constant dense<0.000000e+00> : vector<16x64xf32>
    %244 = tpu.matmul %183, %8, %cst_61 {dimension_numbers = #tpu.dot_dimension_numbers<[1], [0], [0], [1], [0, 0, 1, 1], [], []>} : vector<16x32xf32>, vector<32x64xf32>, vector<16x64xf32> -> vector<16x64xf32>
    %245 = arith.addf %243, %244 : vector<16x64xf32>
    %246 = arith.addf %245, %65 : vector<16x64xf32>
    %247 = arith.negf %246 : vector<16x64xf32>
    %248 = math.exp %247 : vector<16x64xf32>
    %cst_62 = arith.constant 1.000000e+00 : f32
    %249 = vector.broadcast %cst_62 : f32 to vector<16x64xf32>
    %250 = arith.addf %249, %248 : vector<16x64xf32>
    %251 = arith.divf %249, %250 : vector<16x64xf32>
    %252 = vector.extract_strided_slice %251 {offsets = [0, 0], sizes = [16, 32], strides = [1, 1]} : vector<16x64xf32> to vector<16x32xf32>
    %253 = vector.extract_strided_slice %251 {offsets = [0, 32], sizes = [16, 32], strides = [1, 1]} : vector<16x64xf32> to vector<16x32xf32>
    %254 = vector.broadcast %79 : vector<16x1xf32> to vector<16x32xf32>
    %255 = arith.mulf %254, %67 : vector<16x32xf32>
    %cst_63 = arith.constant dense<0.000000e+00> : vector<16x32xf32>
    %256 = tpu.matmul %213, %11, %cst_63 {dimension_numbers = #tpu.dot_dimension_numbers<[1], [0], [0], [1], [0, 0, 1, 1], [], []>} : vector<16x16xf32>, vector<16x32xf32>, vector<16x32xf32> -> vector<16x32xf32>
    %257 = arith.addf %255, %256 : vector<16x32xf32>
    %258 = arith.mulf %253, %183 : vector<16x32xf32>
    %cst_64 = arith.constant dense<0.000000e+00> : vector<16x32xf32>
    %259 = tpu.matmul %258, %12, %cst_64 {dimension_numbers = #tpu.dot_dimension_numbers<[1], [0], [0], [1], [0, 0, 1, 1], [], []>} : vector<16x32xf32>, vector<32x32xf32>, vector<16x32xf32> -> vector<16x32xf32>
    %260 = arith.addf %257, %259 : vector<16x32xf32>
    %261 = arith.addf %260, %69 : vector<16x32xf32>
    %262 = math.tanh %261 : vector<16x32xf32>
    %263 = arith.mulf %252, %183 : vector<16x32xf32>
    %cst_65 = arith.constant 1.000000e+00 : f32
    %264 = vector.broadcast %cst_65 : f32 to vector<16x32xf32>
    %265 = arith.subf %264, %252 : vector<16x32xf32>
    %266 = arith.mulf %265, %262 : vector<16x32xf32>
    %267 = arith.addf %263, %266 : vector<16x32xf32>
    %268 = arith.mulf %267, %71 : vector<16x32xf32>
    %cst_66 = arith.constant dense<0.000000e+00> : vector<16xf32>
    %269 = vector.multi_reduction <add>, %268, %cst_66 [1] : vector<16x32xf32> to vector<16xf32>
    %270 = vector.shape_cast %269 : vector<16xf32> to vector<16x1xf32>
    %271 = arith.addf %270, %73 : vector<16x1xf32>
    %272 = vector.broadcast %96 : vector<16x1xf32> to vector<16x16xf32>
    %273 = arith.mulf %272, %18 : vector<16x16xf32>
    %274 = vector.broadcast %97 : vector<16x1xf32> to vector<16x16xf32>
    %275 = arith.mulf %274, %21 : vector<16x16xf32>
    %276 = arith.addf %273, %275 : vector<16x16xf32>
    %277 = vector.broadcast %98 : vector<16x1xf32> to vector<16x16xf32>
    %278 = arith.mulf %277, %24 : vector<16x16xf32>
    %279 = arith.addf %276, %278 : vector<16x16xf32>
    %280 = vector.extract_strided_slice %239 {offsets = [0, 0], sizes = [16, 1], strides = [1, 1]} : vector<16x4xf32> to vector<16x1xf32>
    %281 = vector.extract_strided_slice %239 {offsets = [0, 1], sizes = [16, 1], strides = [1, 1]} : vector<16x4xf32> to vector<16x1xf32>
    %282 = vector.extract_strided_slice %239 {offsets = [0, 2], sizes = [16, 1], strides = [1, 1]} : vector<16x4xf32> to vector<16x1xf32>
    %283 = vector.extract_strided_slice %239 {offsets = [0, 3], sizes = [16, 1], strides = [1, 1]} : vector<16x4xf32> to vector<16x1xf32>
    %284 = vector.broadcast %280 : vector<16x1xf32> to vector<16x16xf32>
    %285 = arith.mulf %284, %27 : vector<16x16xf32>
    %286 = vector.broadcast %281 : vector<16x1xf32> to vector<16x16xf32>
    %287 = arith.mulf %286, %30 : vector<16x16xf32>
    %288 = arith.addf %285, %287 : vector<16x16xf32>
    %289 = vector.broadcast %282 : vector<16x1xf32> to vector<16x16xf32>
    %290 = arith.mulf %289, %33 : vector<16x16xf32>
    %291 = arith.addf %288, %290 : vector<16x16xf32>
    %292 = vector.broadcast %283 : vector<16x1xf32> to vector<16x16xf32>
    %293 = arith.mulf %292, %36 : vector<16x16xf32>
    %294 = arith.addf %291, %293 : vector<16x16xf32>
    %295 = arith.addf %279, %294 : vector<16x16xf32>
    %296 = arith.addf %295, %38 : vector<16x16xf32>
    %297 = math.tanh %296 : vector<16x16xf32>
    %298 = vector.broadcast %96 : vector<16x1xf32> to vector<16x4xf32>
    %299 = arith.mulf %298, %41 : vector<16x4xf32>
    %300 = vector.broadcast %97 : vector<16x1xf32> to vector<16x4xf32>
    %301 = arith.mulf %300, %44 : vector<16x4xf32>
    %302 = arith.addf %299, %301 : vector<16x4xf32>
    %303 = vector.broadcast %98 : vector<16x1xf32> to vector<16x4xf32>
    %304 = arith.mulf %303, %47 : vector<16x4xf32>
    %305 = arith.addf %302, %304 : vector<16x4xf32>
    %306 = vector.extract_strided_slice %239 {offsets = [0, 0], sizes = [16, 1], strides = [1, 1]} : vector<16x4xf32> to vector<16x1xf32>
    %307 = vector.extract_strided_slice %239 {offsets = [0, 1], sizes = [16, 1], strides = [1, 1]} : vector<16x4xf32> to vector<16x1xf32>
    %308 = vector.extract_strided_slice %239 {offsets = [0, 2], sizes = [16, 1], strides = [1, 1]} : vector<16x4xf32> to vector<16x1xf32>
    %309 = vector.extract_strided_slice %239 {offsets = [0, 3], sizes = [16, 1], strides = [1, 1]} : vector<16x4xf32> to vector<16x1xf32>
    %310 = vector.broadcast %306 : vector<16x1xf32> to vector<16x4xf32>
    %311 = arith.mulf %310, %50 : vector<16x4xf32>
    %312 = vector.broadcast %307 : vector<16x1xf32> to vector<16x4xf32>
    %313 = arith.mulf %312, %53 : vector<16x4xf32>
    %314 = arith.addf %311, %313 : vector<16x4xf32>
    %315 = vector.broadcast %308 : vector<16x1xf32> to vector<16x4xf32>
    %316 = arith.mulf %315, %56 : vector<16x4xf32>
    %317 = arith.addf %314, %316 : vector<16x4xf32>
    %318 = vector.broadcast %309 : vector<16x1xf32> to vector<16x4xf32>
    %319 = arith.mulf %318, %59 : vector<16x4xf32>
    %320 = arith.addf %317, %319 : vector<16x4xf32>
    %321 = arith.addf %305, %320 : vector<16x4xf32>
    %322 = arith.addf %321, %61 : vector<16x4xf32>
    %323 = math.tanh %322 : vector<16x4xf32>
    %324 = vector.broadcast %81 : vector<16x1xf32> to vector<16x64xf32>
    %325 = arith.mulf %324, %63 : vector<16x64xf32>
    %cst_67 = arith.constant dense<0.000000e+00> : vector<16x64xf32>
    %326 = tpu.matmul %297, %7, %cst_67 {dimension_numbers = #tpu.dot_dimension_numbers<[1], [0], [0], [1], [0, 0, 1, 1], [], []>} : vector<16x16xf32>, vector<16x64xf32>, vector<16x64xf32> -> vector<16x64xf32>
    %327 = arith.addf %325, %326 : vector<16x64xf32>
    %cst_68 = arith.constant dense<0.000000e+00> : vector<16x64xf32>
    %328 = tpu.matmul %267, %8, %cst_68 {dimension_numbers = #tpu.dot_dimension_numbers<[1], [0], [0], [1], [0, 0, 1, 1], [], []>} : vector<16x32xf32>, vector<32x64xf32>, vector<16x64xf32> -> vector<16x64xf32>
    %329 = arith.addf %327, %328 : vector<16x64xf32>
    %330 = arith.addf %329, %65 : vector<16x64xf32>
    %331 = arith.negf %330 : vector<16x64xf32>
    %332 = math.exp %331 : vector<16x64xf32>
    %cst_69 = arith.constant 1.000000e+00 : f32
    %333 = vector.broadcast %cst_69 : f32 to vector<16x64xf32>
    %334 = arith.addf %333, %332 : vector<16x64xf32>
    %335 = arith.divf %333, %334 : vector<16x64xf32>
    %336 = vector.extract_strided_slice %335 {offsets = [0, 0], sizes = [16, 32], strides = [1, 1]} : vector<16x64xf32> to vector<16x32xf32>
    %337 = vector.extract_strided_slice %335 {offsets = [0, 32], sizes = [16, 32], strides = [1, 1]} : vector<16x64xf32> to vector<16x32xf32>
    %338 = vector.broadcast %81 : vector<16x1xf32> to vector<16x32xf32>
    %339 = arith.mulf %338, %67 : vector<16x32xf32>
    %cst_70 = arith.constant dense<0.000000e+00> : vector<16x32xf32>
    %340 = tpu.matmul %297, %11, %cst_70 {dimension_numbers = #tpu.dot_dimension_numbers<[1], [0], [0], [1], [0, 0, 1, 1], [], []>} : vector<16x16xf32>, vector<16x32xf32>, vector<16x32xf32> -> vector<16x32xf32>
    %341 = arith.addf %339, %340 : vector<16x32xf32>
    %342 = arith.mulf %337, %267 : vector<16x32xf32>
    %cst_71 = arith.constant dense<0.000000e+00> : vector<16x32xf32>
    %343 = tpu.matmul %342, %12, %cst_71 {dimension_numbers = #tpu.dot_dimension_numbers<[1], [0], [0], [1], [0, 0, 1, 1], [], []>} : vector<16x32xf32>, vector<32x32xf32>, vector<16x32xf32> -> vector<16x32xf32>
    %344 = arith.addf %341, %343 : vector<16x32xf32>
    %345 = arith.addf %344, %69 : vector<16x32xf32>
    %346 = math.tanh %345 : vector<16x32xf32>
    %347 = arith.mulf %336, %267 : vector<16x32xf32>
    %cst_72 = arith.constant 1.000000e+00 : f32
    %348 = vector.broadcast %cst_72 : f32 to vector<16x32xf32>
    %349 = arith.subf %348, %336 : vector<16x32xf32>
    %350 = arith.mulf %349, %346 : vector<16x32xf32>
    %351 = arith.addf %347, %350 : vector<16x32xf32>
    %352 = arith.mulf %351, %71 : vector<16x32xf32>
    %cst_73 = arith.constant dense<0.000000e+00> : vector<16xf32>
    %353 = vector.multi_reduction <add>, %352, %cst_73 [1] : vector<16x32xf32> to vector<16xf32>
    %354 = vector.shape_cast %353 : vector<16xf32> to vector<16x1xf32>
    %355 = arith.addf %354, %73 : vector<16x1xf32>
    %356 = vector.broadcast %101 : vector<16x1xf32> to vector<16x16xf32>
    %357 = arith.mulf %356, %18 : vector<16x16xf32>
    %358 = vector.broadcast %102 : vector<16x1xf32> to vector<16x16xf32>
    %359 = arith.mulf %358, %21 : vector<16x16xf32>
    %360 = arith.addf %357, %359 : vector<16x16xf32>
    %361 = vector.broadcast %103 : vector<16x1xf32> to vector<16x16xf32>
    %362 = arith.mulf %361, %24 : vector<16x16xf32>
    %363 = arith.addf %360, %362 : vector<16x16xf32>
    %364 = vector.extract_strided_slice %323 {offsets = [0, 0], sizes = [16, 1], strides = [1, 1]} : vector<16x4xf32> to vector<16x1xf32>
    %365 = vector.extract_strided_slice %323 {offsets = [0, 1], sizes = [16, 1], strides = [1, 1]} : vector<16x4xf32> to vector<16x1xf32>
    %366 = vector.extract_strided_slice %323 {offsets = [0, 2], sizes = [16, 1], strides = [1, 1]} : vector<16x4xf32> to vector<16x1xf32>
    %367 = vector.extract_strided_slice %323 {offsets = [0, 3], sizes = [16, 1], strides = [1, 1]} : vector<16x4xf32> to vector<16x1xf32>
    %368 = vector.broadcast %364 : vector<16x1xf32> to vector<16x16xf32>
    %369 = arith.mulf %368, %27 : vector<16x16xf32>
    %370 = vector.broadcast %365 : vector<16x1xf32> to vector<16x16xf32>
    %371 = arith.mulf %370, %30 : vector<16x16xf32>
    %372 = arith.addf %369, %371 : vector<16x16xf32>
    %373 = vector.broadcast %366 : vector<16x1xf32> to vector<16x16xf32>
    %374 = arith.mulf %373, %33 : vector<16x16xf32>
    %375 = arith.addf %372, %374 : vector<16x16xf32>
    %376 = vector.broadcast %367 : vector<16x1xf32> to vector<16x16xf32>
    %377 = arith.mulf %376, %36 : vector<16x16xf32>
    %378 = arith.addf %375, %377 : vector<16x16xf32>
    %379 = arith.addf %363, %378 : vector<16x16xf32>
    %380 = arith.addf %379, %38 : vector<16x16xf32>
    %381 = math.tanh %380 : vector<16x16xf32>
    %382 = vector.broadcast %101 : vector<16x1xf32> to vector<16x4xf32>
    %383 = arith.mulf %382, %41 : vector<16x4xf32>
    %384 = vector.broadcast %102 : vector<16x1xf32> to vector<16x4xf32>
    %385 = arith.mulf %384, %44 : vector<16x4xf32>
    %386 = arith.addf %383, %385 : vector<16x4xf32>
    %387 = vector.broadcast %103 : vector<16x1xf32> to vector<16x4xf32>
    %388 = arith.mulf %387, %47 : vector<16x4xf32>
    %389 = arith.addf %386, %388 : vector<16x4xf32>
    %390 = vector.extract_strided_slice %323 {offsets = [0, 0], sizes = [16, 1], strides = [1, 1]} : vector<16x4xf32> to vector<16x1xf32>
    %391 = vector.extract_strided_slice %323 {offsets = [0, 1], sizes = [16, 1], strides = [1, 1]} : vector<16x4xf32> to vector<16x1xf32>
    %392 = vector.extract_strided_slice %323 {offsets = [0, 2], sizes = [16, 1], strides = [1, 1]} : vector<16x4xf32> to vector<16x1xf32>
    %393 = vector.extract_strided_slice %323 {offsets = [0, 3], sizes = [16, 1], strides = [1, 1]} : vector<16x4xf32> to vector<16x1xf32>
    %394 = vector.broadcast %390 : vector<16x1xf32> to vector<16x4xf32>
    %395 = arith.mulf %394, %50 : vector<16x4xf32>
    %396 = vector.broadcast %391 : vector<16x1xf32> to vector<16x4xf32>
    %397 = arith.mulf %396, %53 : vector<16x4xf32>
    %398 = arith.addf %395, %397 : vector<16x4xf32>
    %399 = vector.broadcast %392 : vector<16x1xf32> to vector<16x4xf32>
    %400 = arith.mulf %399, %56 : vector<16x4xf32>
    %401 = arith.addf %398, %400 : vector<16x4xf32>
    %402 = vector.broadcast %393 : vector<16x1xf32> to vector<16x4xf32>
    %403 = arith.mulf %402, %59 : vector<16x4xf32>
    %404 = arith.addf %401, %403 : vector<16x4xf32>
    %405 = arith.addf %389, %404 : vector<16x4xf32>
    %406 = arith.addf %405, %61 : vector<16x4xf32>
    %407 = math.tanh %406 : vector<16x4xf32>
    %408 = vector.broadcast %83 : vector<16x1xf32> to vector<16x64xf32>
    %409 = arith.mulf %408, %63 : vector<16x64xf32>
    %cst_74 = arith.constant dense<0.000000e+00> : vector<16x64xf32>
    %410 = tpu.matmul %381, %7, %cst_74 {dimension_numbers = #tpu.dot_dimension_numbers<[1], [0], [0], [1], [0, 0, 1, 1], [], []>} : vector<16x16xf32>, vector<16x64xf32>, vector<16x64xf32> -> vector<16x64xf32>
    %411 = arith.addf %409, %410 : vector<16x64xf32>
    %cst_75 = arith.constant dense<0.000000e+00> : vector<16x64xf32>
    %412 = tpu.matmul %351, %8, %cst_75 {dimension_numbers = #tpu.dot_dimension_numbers<[1], [0], [0], [1], [0, 0, 1, 1], [], []>} : vector<16x32xf32>, vector<32x64xf32>, vector<16x64xf32> -> vector<16x64xf32>
    %413 = arith.addf %411, %412 : vector<16x64xf32>
    %414 = arith.addf %413, %65 : vector<16x64xf32>
    %415 = arith.negf %414 : vector<16x64xf32>
    %416 = math.exp %415 : vector<16x64xf32>
    %cst_76 = arith.constant 1.000000e+00 : f32
    %417 = vector.broadcast %cst_76 : f32 to vector<16x64xf32>
    %418 = arith.addf %417, %416 : vector<16x64xf32>
    %419 = arith.divf %417, %418 : vector<16x64xf32>
    %420 = vector.extract_strided_slice %419 {offsets = [0, 0], sizes = [16, 32], strides = [1, 1]} : vector<16x64xf32> to vector<16x32xf32>
    %421 = vector.extract_strided_slice %419 {offsets = [0, 32], sizes = [16, 32], strides = [1, 1]} : vector<16x64xf32> to vector<16x32xf32>
    %422 = vector.broadcast %83 : vector<16x1xf32> to vector<16x32xf32>
    %423 = arith.mulf %422, %67 : vector<16x32xf32>
    %cst_77 = arith.constant dense<0.000000e+00> : vector<16x32xf32>
    %424 = tpu.matmul %381, %11, %cst_77 {dimension_numbers = #tpu.dot_dimension_numbers<[1], [0], [0], [1], [0, 0, 1, 1], [], []>} : vector<16x16xf32>, vector<16x32xf32>, vector<16x32xf32> -> vector<16x32xf32>
    %425 = arith.addf %423, %424 : vector<16x32xf32>
    %426 = arith.mulf %421, %351 : vector<16x32xf32>
    %cst_78 = arith.constant dense<0.000000e+00> : vector<16x32xf32>
    %427 = tpu.matmul %426, %12, %cst_78 {dimension_numbers = #tpu.dot_dimension_numbers<[1], [0], [0], [1], [0, 0, 1, 1], [], []>} : vector<16x32xf32>, vector<32x32xf32>, vector<16x32xf32> -> vector<16x32xf32>
    %428 = arith.addf %425, %427 : vector<16x32xf32>
    %429 = arith.addf %428, %69 : vector<16x32xf32>
    %430 = math.tanh %429 : vector<16x32xf32>
    %431 = arith.mulf %420, %351 : vector<16x32xf32>
    %cst_79 = arith.constant 1.000000e+00 : f32
    %432 = vector.broadcast %cst_79 : f32 to vector<16x32xf32>
    %433 = arith.subf %432, %420 : vector<16x32xf32>
    %434 = arith.mulf %433, %430 : vector<16x32xf32>
    %435 = arith.addf %431, %434 : vector<16x32xf32>
    %436 = arith.mulf %435, %71 : vector<16x32xf32>
    %cst_80 = arith.constant dense<0.000000e+00> : vector<16xf32>
    %437 = vector.multi_reduction <add>, %436, %cst_80 [1] : vector<16x32xf32> to vector<16xf32>
    %438 = vector.shape_cast %437 : vector<16xf32> to vector<16x1xf32>
    %439 = arith.addf %438, %73 : vector<16x1xf32>
    %c0_81 = arith.constant 0 : index
    %c0_82 = arith.constant 0 : index
    %440 = vector.load %arg19[%c0_81, %c0_82] : memref<16x5xf32, #tpu.memory_space<vmem>>, vector<16x1xf32>
    tpu.vector_store %arg19[%c0_81, %c0_82], %187 {strides = array<i32>} : memref<16x5xf32, #tpu.memory_space<vmem>>, vector<16x1xf32>,
    %c0_83 = arith.constant 0 : index
    %c1_84 = arith.constant 1 : index
    %441 = vector.load %arg19[%c0_83, %c1_84] : memref<16x5xf32, #tpu.memory_space<vmem>>, vector<16x1xf32>
    tpu.vector_store %arg19[%c0_83, %c1_84], %271 {strides = array<i32>} : memref<16x5xf32, #tpu.memory_space<vmem>>, vector<16x1xf32>,
    %c0_85 = arith.constant 0 : index
    %c2_86 = arith.constant 2 : index
    %442 = vector.load %arg19[%c0_85, %c2_86] : memref<16x5xf32, #tpu.memory_space<vmem>>, vector<16x1xf32>
    tpu.vector_store %arg19[%c0_85, %c2_86], %355 {strides = array<i32>} : memref<16x5xf32, #tpu.memory_space<vmem>>, vector<16x1xf32>,
    %c0_87 = arith.constant 0 : index
    %c3_88 = arith.constant 3 : index
    %443 = vector.load %arg19[%c0_87, %c3_88] : memref<16x5xf32, #tpu.memory_space<vmem>>, vector<16x1xf32>
    tpu.vector_store %arg19[%c0_87, %c3_88], %439 {strides = array<i32>} : memref<16x5xf32, #tpu.memory_space<vmem>>, vector<16x1xf32>,
    %444 = vector.broadcast %102 : vector<16x1xf32> to vector<16x16xf32>
    %445 = arith.mulf %444, %18 : vector<16x16xf32>
    %446 = vector.broadcast %103 : vector<16x1xf32> to vector<16x16xf32>
    %447 = arith.mulf %446, %21 : vector<16x16xf32>
    %448 = arith.addf %445, %447 : vector<16x16xf32>
    %449 = vector.broadcast %439 : vector<16x1xf32> to vector<16x16xf32>
    %450 = arith.mulf %449, %24 : vector<16x16xf32>
    %451 = arith.addf %448, %450 : vector<16x16xf32>
    %452 = vector.extract_strided_slice %407 {offsets = [0, 0], sizes = [16, 1], strides = [1, 1]} : vector<16x4xf32> to vector<16x1xf32>
    %453 = vector.extract_strided_slice %407 {offsets = [0, 1], sizes = [16, 1], strides = [1, 1]} : vector<16x4xf32> to vector<16x1xf32>
    %454 = vector.extract_strided_slice %407 {offsets = [0, 2], sizes = [16, 1], strides = [1, 1]} : vector<16x4xf32> to vector<16x1xf32>
    %455 = vector.extract_strided_slice %407 {offsets = [0, 3], sizes = [16, 1], strides = [1, 1]} : vector<16x4xf32> to vector<16x1xf32>
    %456 = vector.broadcast %452 : vector<16x1xf32> to vector<16x16xf32>
    %457 = arith.mulf %456, %27 : vector<16x16xf32>
    %458 = vector.broadcast %453 : vector<16x1xf32> to vector<16x16xf32>
    %459 = arith.mulf %458, %30 : vector<16x16xf32>
    %460 = arith.addf %457, %459 : vector<16x16xf32>
    %461 = vector.broadcast %454 : vector<16x1xf32> to vector<16x16xf32>
    %462 = arith.mulf %461, %33 : vector<16x16xf32>
    %463 = arith.addf %460, %462 : vector<16x16xf32>
    %464 = vector.broadcast %455 : vector<16x1xf32> to vector<16x16xf32>
    %465 = arith.mulf %464, %36 : vector<16x16xf32>
    %466 = arith.addf %463, %465 : vector<16x16xf32>
    %467 = arith.addf %451, %466 : vector<16x16xf32>
    %468 = arith.addf %467, %38 : vector<16x16xf32>
    %469 = math.tanh %468 : vector<16x16xf32>
    %470 = vector.broadcast %439 : vector<16x1xf32> to vector<16x64xf32>
    %471 = arith.mulf %470, %63 : vector<16x64xf32>
    %cst_89 = arith.constant dense<0.000000e+00> : vector<16x64xf32>
    %472 = tpu.matmul %469, %7, %cst_89 {dimension_numbers = #tpu.dot_dimension_numbers<[1], [0], [0], [1], [0, 0, 1, 1], [], []>} : vector<16x16xf32>, vector<16x64xf32>, vector<16x64xf32> -> vector<16x64xf32>
    %473 = arith.addf %471, %472 : vector<16x64xf32>
    %cst_90 = arith.constant dense<0.000000e+00> : vector<16x64xf32>
    %474 = tpu.matmul %435, %8, %cst_90 {dimension_numbers = #tpu.dot_dimension_numbers<[1], [0], [0], [1], [0, 0, 1, 1], [], []>} : vector<16x32xf32>, vector<32x64xf32>, vector<16x64xf32> -> vector<16x64xf32>
    %475 = arith.addf %473, %474 : vector<16x64xf32>
    %476 = arith.addf %475, %65 : vector<16x64xf32>
    %477 = arith.negf %476 : vector<16x64xf32>
    %478 = math.exp %477 : vector<16x64xf32>
    %cst_91 = arith.constant 1.000000e+00 : f32
    %479 = vector.broadcast %cst_91 : f32 to vector<16x64xf32>
    %480 = arith.addf %479, %478 : vector<16x64xf32>
    %481 = arith.divf %479, %480 : vector<16x64xf32>
    %482 = vector.extract_strided_slice %481 {offsets = [0, 0], sizes = [16, 32], strides = [1, 1]} : vector<16x64xf32> to vector<16x32xf32>
    %483 = vector.extract_strided_slice %481 {offsets = [0, 32], sizes = [16, 32], strides = [1, 1]} : vector<16x64xf32> to vector<16x32xf32>
    %484 = vector.broadcast %439 : vector<16x1xf32> to vector<16x32xf32>
    %485 = arith.mulf %484, %67 : vector<16x32xf32>
    %cst_92 = arith.constant dense<0.000000e+00> : vector<16x32xf32>
    %486 = tpu.matmul %469, %11, %cst_92 {dimension_numbers = #tpu.dot_dimension_numbers<[1], [0], [0], [1], [0, 0, 1, 1], [], []>} : vector<16x16xf32>, vector<16x32xf32>, vector<16x32xf32> -> vector<16x32xf32>
    %487 = arith.addf %485, %486 : vector<16x32xf32>
    %488 = arith.mulf %483, %435 : vector<16x32xf32>
    %cst_93 = arith.constant dense<0.000000e+00> : vector<16x32xf32>
    %489 = tpu.matmul %488, %12, %cst_93 {dimension_numbers = #tpu.dot_dimension_numbers<[1], [0], [0], [1], [0, 0, 1, 1], [], []>} : vector<16x32xf32>, vector<32x32xf32>, vector<16x32xf32> -> vector<16x32xf32>
    %490 = arith.addf %487, %489 : vector<16x32xf32>
    %491 = arith.addf %490, %69 : vector<16x32xf32>
    %492 = math.tanh %491 : vector<16x32xf32>
    %493 = arith.mulf %482, %435 : vector<16x32xf32>
    %cst_94 = arith.constant 1.000000e+00 : f32
    %494 = vector.broadcast %cst_94 : f32 to vector<16x32xf32>
    %495 = arith.subf %494, %482 : vector<16x32xf32>
    %496 = arith.mulf %495, %492 : vector<16x32xf32>
    %497 = arith.addf %493, %496 : vector<16x32xf32>
    %498 = arith.mulf %497, %71 : vector<16x32xf32>
    %cst_95 = arith.constant dense<0.000000e+00> : vector<16xf32>
    %499 = vector.multi_reduction <add>, %498, %cst_95 [1] : vector<16x32xf32> to vector<16xf32>
    %500 = vector.shape_cast %499 : vector<16xf32> to vector<16x1xf32>
    %501 = arith.addf %500, %73 : vector<16x1xf32>
    %c0_96 = arith.constant 0 : index
    %c4 = arith.constant 4 : index
    %502 = vector.load %arg19[%c0_96, %c4] : memref<16x5xf32, #tpu.memory_space<vmem>>, vector<16x1xf32>
    tpu.vector_store %arg19[%c0_96, %c4], %501 {strides = array<i32>} : memref<16x5xf32, #tpu.memory_space<vmem>>, vector<16x1xf32>,
    return
  }
  func.func @transform_0(%arg0: i32) -> (i32, i32, i32) {
    %c0_i32 = arith.constant 0 : i32
    %c0_i32_0 = arith.constant 0 : i32
    %c0_i32_1 = arith.constant 0 : i32
    %c0_i32_2 = arith.constant 0 : i32
    return %c0_i32, %c0_i32_0, %c0_i32_1 : i32, i32, i32
  }
  func.func @transform_1(%arg0: i32) -> (i32, i32, i32) {
    %c0_i32 = arith.constant 0 : i32
    %c0_i32_0 = arith.constant 0 : i32
    %c0_i32_1 = arith.constant 0 : i32
    %c0_i32_2 = arith.constant 0 : i32
    return %c0_i32, %c0_i32_0, %c0_i32_1 : i32, i32, i32
  }
  func.func @transform_2(%arg0: i32) -> (i32, i32) {
    %c0_i32 = arith.constant 0 : i32
    %c0_i32_0 = arith.constant 0 : i32
    %c0_i32_1 = arith.constant 0 : i32
    return %c0_i32, %c0_i32_0 : i32, i32
  }
  func.func @transform_3(%arg0: i32) -> (i32, i32) {
    %c0_i32 = arith.constant 0 : i32
    %c0_i32_0 = arith.constant 0 : i32
    %c0_i32_1 = arith.constant 0 : i32
    return %c0_i32, %c0_i32_0 : i32, i32
  }
  func.func @transform_4(%arg0: i32) -> (i32, i32) {
    %c0_i32 = arith.constant 0 : i32
    %c0_i32_0 = arith.constant 0 : i32
    %c0_i32_1 = arith.constant 0 : i32
    return %c0_i32, %c0_i32_0 : i32, i32
  }
  func.func @transform_5(%arg0: i32) -> (i32, i32) {
    %c0_i32 = arith.constant 0 : i32
    %c0_i32_0 = arith.constant 0 : i32
    %c0_i32_1 = arith.constant 0 : i32
    return %c0_i32, %c0_i32_0 : i32, i32
  }
  func.func @transform_6(%arg0: i32) -> (i32, i32) {
    %c0_i32 = arith.constant 0 : i32
    %c0_i32_0 = arith.constant 0 : i32
    %c0_i32_1 = arith.constant 0 : i32
    return %c0_i32, %c0_i32_0 : i32, i32
  }
  func.func @transform_7(%arg0: i32) -> (i32, i32) {
    %c0_i32 = arith.constant 0 : i32
    %c0_i32_0 = arith.constant 0 : i32
    %c0_i32_1 = arith.constant 0 : i32
    return %c0_i32, %c0_i32_0 : i32, i32
  }
  func.func @transform_8(%arg0: i32) -> (i32, i32) {
    %c0_i32 = arith.constant 0 : i32
    %c0_i32_0 = arith.constant 0 : i32
    %c0_i32_1 = arith.constant 0 : i32
    return %c0_i32, %c0_i32_0 : i32, i32
  }
  func.func @transform_9(%arg0: i32) -> (i32, i32) {
    %c0_i32 = arith.constant 0 : i32
    %c0_i32_0 = arith.constant 0 : i32
    %c0_i32_1 = arith.constant 0 : i32
    return %c0_i32, %c0_i32_0 : i32, i32
  }
  func.func @transform_10(%arg0: i32) -> (i32, i32) {
    %c0_i32 = arith.constant 0 : i32
    %c0_i32_0 = arith.constant 0 : i32
    %c0_i32_1 = arith.constant 0 : i32
    return %c0_i32, %c0_i32_0 : i32, i32
  }
  func.func @transform_11(%arg0: i32) -> (i32, i32) {
    %c0_i32 = arith.constant 0 : i32
    %c0_i32_0 = arith.constant 0 : i32
    %c0_i32_1 = arith.constant 0 : i32
    return %c0_i32, %c0_i32_0 : i32, i32
  }
  func.func @transform_12(%arg0: i32) -> (i32, i32) {
    %c0_i32 = arith.constant 0 : i32
    %c0_i32_0 = arith.constant 0 : i32
    %c0_i32_1 = arith.constant 0 : i32
    return %c0_i32, %c0_i32_0 : i32, i32
  }
  func.func @transform_13(%arg0: i32) -> (i32, i32) {
    %c0_i32 = arith.constant 0 : i32
    %c0_i32_0 = arith.constant 0 : i32
    %c0_i32_1 = arith.constant 0 : i32
    return %c0_i32, %c0_i32_0 : i32, i32
  }
  func.func @transform_14(%arg0: i32) -> (i32, i32) {
    %c0_i32 = arith.constant 0 : i32
    %c0_i32_0 = arith.constant 0 : i32
    %c0_i32_1 = arith.constant 0 : i32
    return %c0_i32, %c0_i32_0 : i32, i32
  }
  func.func @transform_15(%arg0: i32) -> (i32, i32) {
    %c0_i32 = arith.constant 0 : i32
    %c0_i32_0 = arith.constant 0 : i32
    %c0_i32_1 = arith.constant 0 : i32
    return %c0_i32, %c0_i32_0 : i32, i32
  }
  func.func @transform_16(%arg0: i32) -> (i32, i32) {
    %c0_i32 = arith.constant 0 : i32
    %c0_i32_0 = arith.constant 0 : i32
    %c0_i32_1 = arith.constant 0 : i32
    return %c0_i32, %c0_i32_0 : i32, i32
  }
  func.func @transform_17(%arg0: i32) -> (i32, i32) {
    %c0_i32 = arith.constant 0 : i32
    %c0_i32_0 = arith.constant 0 : i32
    %c0_i32_1 = arith.constant 0 : i32
    return %c0_i32, %c0_i32_0 : i32, i32
  }
  func.func @transform_18(%arg0: i32) -> (i32, i32) {
    %c0_i32 = arith.constant 0 : i32
    %c0_i32_0 = arith.constant 0 : i32
    %c0_i32_1 = arith.constant 0 : i32
    return %c0_i32, %c0_i32_0 : i32, i32
  }
}

</mosaic_0001>

<llo_original>
// kernel: dastn_forward.1
$region0: #{dastn_forward.1}
  #allocation0 [shape = 'u32[]', space=smem, size = 0x4, offset = 0x4, fixed_abs, tag = 'smem constant byte address 0x4 - core index']
  #allocation1 [shape = 'u32[72,128]{1,0:T(1,128)}', space=vmem, size = 0x9000, scoped, tag = 'internal scratch']
  #allocation2 [shape = 'f32[1,1]{1,0:T(1,128)S(1)}', space=vmem, size = 0x200, scoped, tag = 'scoped memory for dastn_forward.1']
  %s0 = inlined_call_operand.vmem [shape: f32[4,16,1], index: 0, kind: input, shape index: {}]
  %s1 = inlined_call_operand.vmem [shape: f32[4,16,3], index: 1, kind: input, shape index: {}]
  %s2 = inlined_call_operand.vmem [shape: f32[3,16], index: 2, kind: input, shape index: {}]
  %s3 = inlined_call_operand.vmem [shape: f32[4,16], index: 3, kind: input, shape index: {}]
  %s4 = inlined_call_operand.vmem [shape: f32[1,16], index: 4, kind: input, shape index: {}]
  %s5 = inlined_call_operand.vmem [shape: f32[3,4], index: 5, kind: input, shape index: {}]
  %s6 = inlined_call_operand.vmem [shape: f32[4,4], index: 6, kind: input, shape index: {}]
  %s7 = inlined_call_operand.vmem [shape: f32[1,4], index: 7, kind: input, shape index: {}]
  %s8 = inlined_call_operand.vmem [shape: f32[1,64], index: 8, kind: input, shape index: {}]
  %s9 = inlined_call_operand.vmem [shape: f32[16,64], index: 9, kind: input, shape index: {}]
  %s10 = inlined_call_operand.vmem [shape: f32[32,64], index: 10, kind: input, shape index: {}]
  %s11 = inlined_call_operand.vmem [shape: f32[1,64], index: 11, kind: input, shape index: {}]
  %s12 = inlined_call_operand.vmem [shape: f32[1,32], index: 12, kind: input, shape index: {}]
  %s13 = inlined_call_operand.vmem [shape: f32[16,32], index: 13, kind: input, shape index: {}]
  %s14 = inlined_call_operand.vmem [shape: f32[32,32], index: 14, kind: input, shape index: {}]
  %s15 = inlined_call_operand.vmem [shape: f32[1,32], index: 15, kind: input, shape index: {}]
  %s16 = inlined_call_operand.vmem [shape: f32[1,32], index: 16, kind: input, shape index: {}]
  %s17 = inlined_call_operand.<no memory space> [shape: f32[1,1], index: 17, kind: input, shape index: {}]
  %s18 = inlined_call_operand.vmem [shape: f32[16,5], index: 18, kind: output, shape index: {}]
  %s19 = sld [smem:[#allocation0]]
  $region82: #{dastn_forward.1} parent=0
    _
  %s21 = ssub.s32 1, %s19
  %s22 = scalar_select 0, %s21, %s19
  %v23 = vstv %s17
  %24 = vst [vmem:[#allocation2] sm:$0x1] %v23
  // Predicated region
  $region2: #{dastn_forward.1} parent=0 // pred_check
    _
  $region3: #{dastn_forward.1} parent=0 // pred_check_branch
    %26 = sbr.rel (0) target = $region5
  $region4: #{dastn_forward.1} parent=0 // pred_region
    _
  $region5: #{dastn_forward.1} parent=0 // pred_fallthru
    _
  // Predicated region
  $region6: #{dastn_forward.1} parent=0 // pred_check
    _
  $region7: #{dastn_forward.1} parent=0 // pred_check_branch
    %28 = sbr.rel (0) target = $region9
  $region8: #{dastn_forward.1} parent=0 // pred_region
    _
  $region9: #{dastn_forward.1} parent=0 // pred_fallthru
    _
  // Predicated region
  $region10: #{dastn_forward.1} parent=0 // pred_check
    _
  $region11: #{dastn_forward.1} parent=0 // pred_check_branch
    %30 = sbr.rel (0) target = $region13
  $region12: #{dastn_forward.1} parent=0 // pred_region
    _
  $region13: #{dastn_forward.1} parent=0 // pred_fallthru
    _
  // Predicated region
  $region14: #{dastn_forward.1} parent=0 // pred_check
    _
  $region15: #{dastn_forward.1} parent=0 // pred_check_branch
    %32 = sbr.rel (0) target = $region17
  $region16: #{dastn_forward.1} parent=0 // pred_region
    _
  $region17: #{dastn_forward.1} parent=0 // pred_fallthru
    _
  // Predicated region
  $region18: #{dastn_forward.1} parent=0 // pred_check
    _
  $region19: #{dastn_forward.1} parent=0 // pred_check_branch
    %34 = sbr.rel (0) target = $region21
  $region20: #{dastn_forward.1} parent=0 // pred_region
    _
  $region21: #{dastn_forward.1} parent=0 // pred_fallthru
    _
  // Predicated region
  $region22: #{dastn_forward.1} parent=0 // pred_check
    _
  $region23: #{dastn_forward.1} parent=0 // pred_check_branch
    %36 = sbr.rel (0) target = $region25
  $region24: #{dastn_forward.1} parent=0 // pred_region
    _
  $region25: #{dastn_forward.1} parent=0 // pred_fallthru
    _
  // Predicated region
  $region26: #{dastn_forward.1} parent=0 // pred_check
    _
  $region27: #{dastn_forward.1} parent=0 // pred_check_branch
    %38 = sbr.rel (0) target = $region29
  $region28: #{dastn_forward.1} parent=0 // pred_region
    _
  $region29: #{dastn_forward.1} parent=0 // pred_fallthru
    _
  // Predicated region
  $region30: #{dastn_forward.1} parent=0 // pred_check
    _
  $region31: #{dastn_forward.1} parent=0 // pred_check_branch
    %40 = sbr.rel (0) target = $region33
  $region32: #{dastn_forward.1} parent=0 // pred_region
    _
  $region33: #{dastn_forward.1} parent=0 // pred_fallthru
    _
  // Predicated region
  $region34: #{dastn_forward.1} parent=0 // pred_check
    _
  $region35: #{dastn_forward.1} parent=0 // pred_check_branch
    %42 = sbr.rel (0) target = $region37
  $region36: #{dastn_forward.1} parent=0 // pred_region
    _
  $region37: #{dastn_forward.1} parent=0 // pred_fallthru
    _
  // Predicated region
  $region38: #{dastn_forward.1} parent=0 // pred_check
    _
  $region39: #{dastn_forward.1} parent=0 // pred_check_branch
    %44 = sbr.rel (0) target = $region41
  $region40: #{dastn_forward.1} parent=0 // pred_region
    _
  $region41: #{dastn_forward.1} parent=0 // pred_fallthru
    _
  // Predicated region
  $region42: #{dastn_forward.1} parent=0 // pred_check
    _
  $region43: #{dastn_forward.1} parent=0 // pred_check_branch
    %46 = sbr.rel (0) target = $region45
  $region44: #{dastn_forward.1} parent=0 // pred_region
    _
  $region45: #{dastn_forward.1} parent=0 // pred_fallthru
    _
  // Predicated region
  $region46: #{dastn_forward.1} parent=0 // pred_check
    _
  $region47: #{dastn_forward.1} parent=0 // pred_check_branch
    %48 = sbr.rel (0) target = $region49
  $region48: #{dastn_forward.1} parent=0 // pred_region
    _
  $region49: #{dastn_forward.1} parent=0 // pred_fallthru
    _
  // Predicated region
  $region50: #{dastn_forward.1} parent=0 // pred_check
    _
  $region51: #{dastn_forward.1} parent=0 // pred_check_branch
    %50 = sbr.rel (0) target = $region53
  $region52: #{dastn_forward.1} parent=0 // pred_region
    _
  $region53: #{dastn_forward.1} parent=0 // pred_fallthru
    _
  // Predicated region
  $region54: #{dastn_forward.1} parent=0 // pred_check
    _
  $region55: #{dastn_forward.1} parent=0 // pred_check_branch
    %52 = sbr.rel (0) target = $region57
  $region56: #{dastn_forward.1} parent=0 // pred_region
    _
  $region57: #{dastn_forward.1} parent=0 // pred_fallthru
    _
  // Predicated region
  $region58: #{dastn_forward.1} parent=0 // pred_check
    _
  $region59: #{dastn_forward.1} parent=0 // pred_check_branch
    %54 = sbr.rel (0) target = $region61
  $region60: #{dastn_forward.1} parent=0 // pred_region
    _
  $region61: #{dastn_forward.1} parent=0 // pred_fallthru
    _
  // Predicated region
  $region62: #{dastn_forward.1} parent=0 // pred_check
    _
  $region63: #{dastn_forward.1} parent=0 // pred_check_branch
    %56 = sbr.rel (0) target = $region65
  $region64: #{dastn_forward.1} parent=0 // pred_region
    _
  $region65: #{dastn_forward.1} parent=0 // pred_fallthru
    _
  // Predicated region
  $region66: #{dastn_forward.1} parent=0 // pred_check
    _
  $region67: #{dastn_forward.1} parent=0 // pred_check_branch
    %58 = sbr.rel (0) target = $region69
  $region68: #{dastn_forward.1} parent=0 // pred_region
    _
  $region69: #{dastn_forward.1} parent=0 // pred_fallthru
    _
  // Predicated region
  $region70: #{dastn_forward.1} parent=0 // pred_check
    _
  $region71: #{dastn_forward.1} parent=0 // pred_check_branch
    %60 = sbr.rel (0) target = $region73
  $region72: #{dastn_forward.1} parent=0 // pred_region
    _
  $region73: #{dastn_forward.1} parent=0 // pred_fallthru
    _
  %v61 = vld [vmem:[%s2] sm:$0x7]
  %v62 = vld [vmem:[%s3] sm:$0xf]
  %v63 = vld [vmem:[%s4] sm:$0x1]
  %v64 = vld [vmem:[%s5] sm:$0x7]
  %v65 = vld [vmem:[%s6] sm:$0xf]
  %v66 = vld [vmem:[%s7] sm:$0x1]
  %v67 = vld [vmem:[%s8] sm:$0x1]
  %v68 = vld [vmem:[%s9] sm:$0xff]
  %v69 = vld [vmem:[%s9 + $0x8] sm:$0xff]
  %v70 = vld [vmem:[%s10] sm:$0xff]
  %v71 = vld [vmem:[%s10 + $0x8] sm:$0xff]
  %v72 = vld [vmem:[%s10 + $0x10] sm:$0xff]
  %v73 = vld [vmem:[%s10 + $0x18] sm:$0xff]
  %v74 = vld [vmem:[%s11] sm:$0x1]
  %v75 = vld [vmem:[%s12] sm:$0x1]
  %v76 = vld [vmem:[%s13] sm:$0xff]
  %v77 = vld [vmem:[%s13 + $0x8] sm:$0xff]
  %v78 = vld [vmem:[%s14] sm:$0xff]
  %v79 = vld [vmem:[%s14 + $0x8] sm:$0xff]
  %v80 = vld [vmem:[%s14 + $0x10] sm:$0xff]
  %v81 = vld [vmem:[%s14 + $0x18] sm:$0xff]
  %v82 = vld [vmem:[%s15] sm:$0x1]
  %v83 = vld [vmem:[%s16] sm:$0x1]
  %v84 = vld [vmem:[#allocation2] sm:$0x1]
  %v85 = vperm.slane %v61, 0
  %v86 = vperm.slane %v61, 1
  %v87 = vperm.slane %v61, 2
  %v88 = vperm.slane %v62, 0
  %v89 = vperm.slane %v62, 1
  %v90 = vperm.slane %v62, 2
  %v91 = vperm.slane %v62, 3
  %v93 = vperm.slane %v63, 0
  %v95 = vperm.slane %v64, 0
  %v96 = vperm.slane %v64, 1
  %v97 = vperm.slane %v64, 2
  %v98 = vperm.slane %v65, 0
  %v99 = vperm.slane %v65, 1
  %v100 = vperm.slane %v65, 2
  %v101 = vperm.slane %v65, 3
  %v103 = vperm.slane %v66, 0
  %v106 = vperm.slane %v67, 0
  %v109 = vperm.slane %v74, 0
  %v112 = vperm.slane %v75, 0
  %v115 = vperm.slane %v82, 0
  %v118 = vperm.slane %v83, 0
  %v121 = vperm.slane %v84, 0
  %v123 = vld [vmem:[%s0] sm:$0xff]
  %v124 = vld [vmem:[%s0 + $0x8] sm:$0xff]
  %s125 = scalar_lea.vmem %s0, 16
  %v126 = vld [vmem:[%s125] sm:$0xff]
  %v127 = vld [vmem:[%s125 + $0x8] sm:$0xff]
  %s128 = scalar_lea.vmem %s0, 32
  %v129 = vld [vmem:[%s128] sm:$0xff]
  %v130 = vld [vmem:[%s128 + $0x8] sm:$0xff]
  %s131 = scalar_lea.vmem %s0, 48
  %v132 = vld [vmem:[%s131] sm:$0xff]
  %v133 = vld [vmem:[%s131 + $0x8] sm:$0xff]
  %v134 = vld [vmem:[%s1] sm:$0xff]
  %v135 = vld [vmem:[%s1 + $0x8] sm:$0xff]
  %s136 = scalar_lea.vmem %s1, 16
  %v137 = vld [vmem:[%s136] sm:$0xff]
  %v138 = vld [vmem:[%s136 + $0x8] sm:$0xff]
  %s139 = scalar_lea.vmem %s1, 32
  %v140 = vld [vmem:[%s139] sm:$0xff]
  %v141 = vld [vmem:[%s139 + $0x8] sm:$0xff]
  %s142 = scalar_lea.vmem %s1, 48
  %v143 = vld [vmem:[%s142] sm:$0xff]
  %v144 = vld [vmem:[%s142 + $0x8] sm:$0xff]
  %146 = vset.pattern.permute.xlu0 0
  %147 = vperm.xlu0 %146, %v134
  %v148 = vpop.permute.xlu0 %147
  %151 = vset.pattern.permute.xlu0 0
  %152 = vperm.xlu0 %151, %v135
  %v153 = vpop.permute.xlu0 %152
  %v155 = vmul.f32 %v148, %v85
  %v156 = vmul.f32 %v153, %v85
  %157 = vset.pattern.permute.xlu0 1
  %158 = vperm.xlu0 %157, %v134
  %v159 = vpop.permute.xlu0 %158
  %161 = vset.pattern.permute.xlu0 1
  %162 = vperm.xlu0 %161, %v135
  %v163 = vpop.permute.xlu0 %162
  %v165 = vmul.f32 %v159, %v86
  %v166 = vmul.f32 %v163, %v86
  %v167 = vadd.f32 %v155, %v165
  %v168 = vadd.f32 %v156, %v166
  %169 = vset.pattern.permute.xlu0 2
  %170 = vperm.xlu0 %169, %v134
  %v171 = vpop.permute.xlu0 %170
  %173 = vset.pattern.permute.xlu0 2
  %174 = vperm.xlu0 %173, %v135
  %v175 = vpop.permute.xlu0 %174
  %v177 = vmul.f32 %v171, %v87
  %v178 = vmul.f32 %v175, %v87
  %v179 = vadd.f32 %v167, %v177
  %v180 = vadd.f32 %v168, %v178
  %v181 = vmul.f32 %v88, 0.0
  %v182 = vmul.f32 %v89, 0.0
  %v183 = vadd.f32 %v181, %v182
  %v184 = vmul.f32 %v90, 0.0
  %v185 = vadd.f32 %v183, %v184
  %v186 = vmul.f32 %v91, 0.0
  %v187 = vadd.f32 %v185, %v186
  %v188 = vadd.f32 %v179, %v187
  %v189 = vadd.f32 %v180, %v187
  %v190 = vadd.f32 %v188, %v93
  %v191 = vadd.f32 %v189, %v93
  %v192 = vtanh.pop %v190
  %v193 = vtanh.pop %v191
  %v194 = vmul.f32 %v148, %v95
  %v195 = vmul.f32 %v153, %v95
  %v196 = vmul.f32 %v159, %v96
  %v197 = vmul.f32 %v163, %v96
  %v198 = vadd.f32 %v194, %v196
  %v199 = vadd.f32 %v195, %v197
  %v200 = vmul.f32 %v171, %v97
  %v201 = vmul.f32 %v175, %v97
  %v202 = vadd.f32 %v198, %v200
  %v203 = vadd.f32 %v199, %v201
  %v204 = vmul.f32 %v98, 0.0
  %v205 = vmul.f32 %v99, 0.0
  %v206 = vadd.f32 %v204, %v205
  %v207 = vmul.f32 %v100, 0.0
  %v208 = vadd.f32 %v206, %v207
  %v209 = vmul.f32 %v101, 0.0
  %v210 = vadd.f32 %v208, %v209
  %v211 = vadd.f32 %v202, %v210
  %v212 = vadd.f32 %v203, %v210
  %v213 = vadd.f32 %v211, %v103
  %v214 = vadd.f32 %v212, %v103
  %v215 = vtanh.pop %v213
  %v216 = vtanh.pop %v214
  %218 = vset.pattern.permute.xlu0 0
  %219 = vperm.xlu0 %218, %v123
  %v220 = vpop.permute.xlu0 %219
  %223 = vset.pattern.permute.xlu0 0
  %224 = vperm.xlu0 %223, %v124
  %v225 = vpop.permute.xlu0 %224
  %v227 = vmul.f32 %v220, %v106
  %v228 = vmul.f32 %v225, %v106
  %vm229 = vcmask 130048
  %v231 = vsel %vm229, %v192, 0
  %v234 = vsel %vm229, %v193, 0
  %236 = vmatpush.msra.mxu0 0.0
  %237 = vmatpush.msra.mxu0 0.0
  %238 = vmatpush.msra.mxu0 0.0
  %239 = vmatpush.msra.mxu0 0.0
  %240 = vmatpush.msra.mxu0 0.0
  %241 = vmatpush.msra.mxu0 0.0
  %242 = vmatpush.msra.mxu0 0.0
  %243 = vmatpush.msra.mxu0 0.0
  %244 = vmatpush.msra.mxu0 0.0
  %245 = vmatpush.msra.mxu0 0.0
  %246 = vmatpush.msra.mxu0 0.0
  %247 = vmatpush.msra.mxu0 0.0
  %248 = vmatpush.msra.mxu0 0.0
  %249 = vmatpush.msra.mxu0 0.0
  %250 = vmatpush.msra.mxu0 %v69
  %251 = vmatpush.msra.mxu0 %v68
  %252 = vmatmul.f32.gmra.mxu0 %v231
  %v253 = vpop.f32.mrf.mxu0
  %v254 = vadd.f32 0.0, %v253
  %255 = vmatmul.f32.gmra.mxu0 %v234
  %v256 = vpop.f32.mrf.mxu0
  %v257 = vadd.f32 0.0, %v256
  %258 = vdwg.mxu0
  %v259 = vadd.f32 %v227, %v254
  %v260 = vadd.f32 %v228, %v257
  %vm261 = vcmask 261120
  %v263 = vsel %vm261, 0.0, 0
  %265 = vmatpush.msra.mxu0 0.0
  %266 = vmatpush.msra.mxu0 0.0
  %267 = vmatpush.msra.mxu0 0.0
  %268 = vmatpush.msra.mxu0 0.0
  %269 = vmatpush.msra.mxu0 0.0
  %270 = vmatpush.msra.mxu0 0.0
  %271 = vmatpush.msra.mxu0 0.0
  %272 = vmatpush.msra.mxu0 0.0
  %273 = vmatpush.msra.mxu0 0.0
  %274 = vmatpush.msra.mxu0 0.0
  %275 = vmatpush.msra.mxu0 0.0
  %276 = vmatpush.msra.mxu0 0.0
  %277 = vmatpush.msra.mxu0 %v73
  %278 = vmatpush.msra.mxu0 %v72
  %279 = vmatpush.msra.mxu0 %v71
  %280 = vmatpush.msra.mxu0 %v70
  %281 = vmatmul.f32.gmra.mxu0 %v263
  %v282 = vpop.f32.mrf.mxu0
  %v283 = vadd.f32 0.0, %v282
  %284 = vmatmul.f32.gmra.mxu0 %v263
  %v285 = vpop.f32.mrf.mxu0
  %v286 = vadd.f32 0.0, %v285
  %287 = vdwg.mxu0
  %v288 = vadd.f32 %v259, %v283
  %v289 = vadd.f32 %v260, %v286
  %v290 = vadd.f32 %v288, %v109
  %v291 = vadd.f32 %v289, %v109
  %v292 = vxor.u32 %v290, 2147483648
  %v293 = vxor.u32 %v291, 2147483648
  %v294 = vmul.f32 %v292, 1.442695
  %v295 = vpow.pop %v294
  %v296 = vmul.f32 %v293, 1.442695
  %v297 = vpow.pop %v296
  %v298 = vadd.f32 %v295, 1.0
  %v299 = vadd.f32 %v297, 1.0
  %v300 = vrcp.pop %v298
  %v301 = vmul.f32 %v298, %v300
  %v302 = vsub.f32 1.0, %v301
  %v303 = vmul.f32 %v300, %v302
  %v304 = vadd.f32 %v300, %v303
  %vm305 = vweird.f32 %v298
  %vm306 = vweird.f32 %v300
  %vm307 = vmor %vm305, %vm306
  %v308 = vsel %vm307, %v300, %v304
  %v309 = vand.u32 2147483647, %v298
  %vm310 = vcmp.eq.f32.partialorder %v309, 8.507059e+37
  %v311 = vand.u32 %v298, 2147483648
  %v312 = vor.u32 1.1754944e-38, %v311
  %v313 = vsel %vm310, %v312, %v308
  %v314 = vmul.f32 1.0, %v313
  %v315 = vrcp.pop %v299
  %v316 = vmul.f32 %v299, %v315
  %v317 = vsub.f32 1.0, %v316
  %v318 = vmul.f32 %v315, %v317
  %v319 = vadd.f32 %v315, %v318
  %vm320 = vweird.f32 %v299
  %vm321 = vweird.f32 %v315
  %vm322 = vmor %vm320, %vm321
  %v323 = vsel %vm322, %v315, %v319
  %v324 = vand.u32 2147483647, %v299
  %vm325 = vcmp.eq.f32.partialorder %v324, 8.507059e+37
  %v326 = vand.u32 %v299, 2147483648
  %v327 = vor.u32 1.1754944e-38, %v326
  %v328 = vsel %vm325, %v327, %v323
  %v329 = vmul.f32 1.0, %v328
  %v330 = vmul.f32 %v220, %v112
  %v331 = vmul.f32 %v225, %v112
  %332 = vmatpush.msra.mxu0 0.0
  %333 = vmatpush.msra.mxu0 0.0
  %334 = vmatpush.msra.mxu0 0.0
  %335 = vmatpush.msra.mxu0 0.0
  %336 = vmatpush.msra.mxu0 0.0
  %337 = vmatpush.msra.mxu0 0.0
  %338 = vmatpush.msra.mxu0 0.0
  %339 = vmatpush.msra.mxu0 0.0
  %340 = vmatpush.msra.mxu0 0.0
  %341 = vmatpush.msra.mxu0 0.0
  %342 = vmatpush.msra.mxu0 0.0
  %343 = vmatpush.msra.mxu0 0.0
  %344 = vmatpush.msra.mxu0 0.0
  %345 = vmatpush.msra.mxu0 0.0
  %346 = vmatpush.msra.mxu0 %v77
  %347 = vmatpush.msra.mxu0 %v76
  %348 = vmatmul.f32.gmra.mxu0 %v231
  %v349 = vpop.f32.mrf.mxu0
  %v350 = vadd.f32 0.0, %v349
  %351 = vmatmul.f32.gmra.mxu0 %v234
  %v352 = vpop.f32.mrf.mxu0
  %v353 = vadd.f32 0.0, %v352
  %354 = vdwg.mxu0
  %v355 = vadd.f32 %v330, %v350
  %v356 = vadd.f32 %v331, %v353
  %v357 = vmul.f32 %v314, 0.0
  %v358 = vmul.f32 %v329, 0.0
  %361 = vrot.lane.b32.xlu0 %v357, 96
  %v362 = vpop.permute.xlu0 %361
  %363 = vrot.lane.b32.xlu0 %v358, 96
  %v364 = vpop.permute.xlu0 %363
  %v365 = vsel %vm261, %v362, 0
  %v367 = vsel %vm261, %v364, 0
  %369 = vmatpush.msra.mxu0 0.0
  %370 = vmatpush.msra.mxu0 0.0
  %371 = vmatpush.msra.mxu0 0.0
  %372 = vmatpush.msra.mxu0 0.0
  %373 = vmatpush.msra.mxu0 0.0
  %374 = vmatpush.msra.mxu0 0.0
  %375 = vmatpush.msra.mxu0 0.0
  %376 = vmatpush.msra.mxu0 0.0
  %377 = vmatpush.msra.mxu0 0.0
  %378 = vmatpush.msra.mxu0 0.0
  %379 = vmatpush.msra.mxu0 0.0
  %380 = vmatpush.msra.mxu0 0.0
  %381 = vmatpush.msra.mxu0 %v81
  %382 = vmatpush.msra.mxu0 %v80
  %383 = vmatpush.msra.mxu0 %v79
  %384 = vmatpush.msra.mxu0 %v78
  %385 = vmatmul.f32.gmra.mxu0 %v365
  %v386 = vpop.f32.mrf.mxu0
  %v387 = vadd.f32 0.0, %v386
  %388 = vmatmul.f32.gmra.mxu0 %v367
  %v389 = vpop.f32.mrf.mxu0
  %v390 = vadd.f32 0.0, %v389
  %391 = vdwg.mxu0
  %v392 = vadd.f32 %v355, %v387
  %v393 = vadd.f32 %v356, %v390
  %v394 = vadd.f32 %v392, %v115
  %v395 = vadd.f32 %v393, %v115
  %v396 = vtanh.pop %v394
  %v397 = vtanh.pop %v395
  %v398 = vsub.f32 1.0, %v314
  %v399 = vsub.f32 1.0, %v329
  %v400 = vmul.f32 %v398, %v396
  %v401 = vmul.f32 %v399, %v397
  %v402 = vadd.f32 %v357, %v400
  %v403 = vadd.f32 %v358, %v401
  %v404 = vmul.f32 %v402, %v118
  %v405 = vmul.f32 %v403, %v118
  %v406 = vsel %vm261, %v404, 0.0
  %407 = vadd.xlane.f32.xlu0 %v406
  %v408 = vpop.xlane.xlu0 %407
  %v409 = vsel %vm261, %v405, 0.0
  %410 = vadd.xlane.f32.xlu0 %v409
  %v411 = vpop.xlane.xlu0 %410
  %v412 = vadd.f32 %v408, %v121
  %v413 = vadd.f32 %v411, %v121
  %415 = vset.pattern.permute.xlu0 0
  %416 = vperm.xlu0 %415, %v137
  %v417 = vpop.permute.xlu0 %416
  %420 = vset.pattern.permute.xlu0 0
  %421 = vperm.xlu0 %420, %v138
  %v422 = vpop.permute.xlu0 %421
  %v424 = vmul.f32 %v417, %v85
  %v425 = vmul.f32 %v422, %v85
  %426 = vset.pattern.permute.xlu0 1
  %427 = vperm.xlu0 %426, %v137
  %v428 = vpop.permute.xlu0 %427
  %430 = vset.pattern.permute.xlu0 1
  %431 = vperm.xlu0 %430, %v138
  %v432 = vpop.permute.xlu0 %431
  %v434 = vmul.f32 %v428, %v86
  %v435 = vmul.f32 %v432, %v86
  %v436 = vadd.f32 %v424, %v434
  %v437 = vadd.f32 %v425, %v435
  %438 = vset.pattern.permute.xlu0 2
  %439 = vperm.xlu0 %438, %v137
  %v440 = vpop.permute.xlu0 %439
  %442 = vset.pattern.permute.xlu0 2
  %443 = vperm.xlu0 %442, %v138
  %v444 = vpop.permute.xlu0 %443
  %v446 = vmul.f32 %v440, %v87
  %v447 = vmul.f32 %v444, %v87
  %v448 = vadd.f32 %v436, %v446
  %v449 = vadd.f32 %v437, %v447
  %451 = vset.pattern.permute.xlu0 0
  %452 = vperm.xlu0 %451, %v215
  %v453 = vpop.permute.xlu0 %452
  %456 = vset.pattern.permute.xlu0 0
  %457 = vperm.xlu0 %456, %v216
  %v458 = vpop.permute.xlu0 %457
  %v460 = vmul.f32 %v453, %v88
  %v461 = vmul.f32 %v458, %v88
  %462 = vset.pattern.permute.xlu0 1
  %463 = vperm.xlu0 %462, %v215
  %v464 = vpop.permute.xlu0 %463
  %466 = vset.pattern.permute.xlu0 1
  %467 = vperm.xlu0 %466, %v216
  %v468 = vpop.permute.xlu0 %467
  %v470 = vmul.f32 %v464, %v89
  %v471 = vmul.f32 %v468, %v89
  %v472 = vadd.f32 %v460, %v470
  %v473 = vadd.f32 %v461, %v471
  %474 = vset.pattern.permute.xlu0 2
  %475 = vperm.xlu0 %474, %v215
  %v476 = vpop.permute.xlu0 %475
  %478 = vset.pattern.permute.xlu0 2
  %479 = vperm.xlu0 %478, %v216
  %v480 = vpop.permute.xlu0 %479
  %v482 = vmul.f32 %v476, %v90
  %v483 = vmul.f32 %v480, %v90
  %v484 = vadd.f32 %v472, %v482
  %v485 = vadd.f32 %v473, %v483
  %486 = vset.pattern.permute.xlu0 3
  %487 = vperm.xlu0 %486, %v215
  %v488 = vpop.permute.xlu0 %487
  %490 = vset.pattern.permute.xlu0 3
  %491 = vperm.xlu0 %490, %v216
  %v492 = vpop.permute.xlu0 %491
  %v494 = vmul.f32 %v488, %v91
  %v495 = vmul.f32 %v492, %v91
  %v496 = vadd.f32 %v484, %v494
  %v497 = vadd.f32 %v485, %v495
  %v498 = vadd.f32 %v448, %v496
  %v499 = vadd.f32 %v449, %v497
  %v500 = vadd.f32 %v498, %v93
  %v501 = vadd.f32 %v499, %v93
  %v502 = vtanh.pop %v500
  %v503 = vtanh.pop %v501
  %v504 = vmul.f32 %v417, %v95
  %v505 = vmul.f32 %v422, %v95
  %v506 = vmul.f32 %v428, %v96
  %v507 = vmul.f32 %v432, %v96
  %v508 = vadd.f32 %v504, %v506
  %v509 = vadd.f32 %v505, %v507
  %v510 = vmul.f32 %v440, %v97
  %v511 = vmul.f32 %v444, %v97
  %v512 = vadd.f32 %v508, %v510
  %v513 = vadd.f32 %v509, %v511
  %v514 = vmul.f32 %v453, %v98
  %v515 = vmul.f32 %v458, %v98
  %v516 = vmul.f32 %v464, %v99
  %v517 = vmul.f32 %v468, %v99
  %v518 = vadd.f32 %v514, %v516
  %v519 = vadd.f32 %v515, %v517
  %v520 = vmul.f32 %v476, %v100
  %v521 = vmul.f32 %v480, %v100
  %v522 = vadd.f32 %v518, %v520
  %v523 = vadd.f32 %v519, %v521
  %v524 = vmul.f32 %v488, %v101
  %v525 = vmul.f32 %v492, %v101
  %v526 = vadd.f32 %v522, %v524
  %v527 = vadd.f32 %v523, %v525
  %v528 = vadd.f32 %v512, %v526
  %v529 = vadd.f32 %v513, %v527
  %v530 = vadd.f32 %v528, %v103
  %v531 = vadd.f32 %v529, %v103
  %v532 = vtanh.pop %v530
  %v533 = vtanh.pop %v531
  %535 = vset.pattern.permute.xlu0 0
  %536 = vperm.xlu0 %535, %v126
  %v537 = vpop.permute.xlu0 %536
  %540 = vset.pattern.permute.xlu0 0
  %541 = vperm.xlu0 %540, %v127
  %v542 = vpop.permute.xlu0 %541
  %v544 = vmul.f32 %v537, %v106
  %v545 = vmul.f32 %v542, %v106
  %v547 = vsel %vm229, %v502, 0
  %v550 = vsel %vm229, %v503, 0
  %552 = vmatpush.msra.mxu0 0.0
  %553 = vmatpush.msra.mxu0 0.0
  %554 = vmatpush.msra.mxu0 0.0
  %555 = vmatpush.msra.mxu0 0.0
  %556 = vmatpush.msra.mxu0 0.0
  %557 = vmatpush.msra.mxu0 0.0
  %558 = vmatpush.msra.mxu0 0.0
  %559 = vmatpush.msra.mxu0 0.0
  %560 = vmatpush.msra.mxu0 0.0
  %561 = vmatpush.msra.mxu0 0.0
  %562 = vmatpush.msra.mxu0 0.0
  %563 = vmatpush.msra.mxu0 0.0
  %564 = vmatpush.msra.mxu0 0.0
  %565 = vmatpush.msra.mxu0 0.0
  %566 = vmatpush.msra.mxu0 %v69
  %567 = vmatpush.msra.mxu0 %v68
  %568 = vmatmul.f32.gmra.mxu0 %v547
  %v569 = vpop.f32.mrf.mxu0
  %v570 = vadd.f32 0.0, %v569
  %571 = vmatmul.f32.gmra.mxu0 %v550
  %v572 = vpop.f32.mrf.mxu0
  %v573 = vadd.f32 0.0, %v572
  %574 = vdwg.mxu0
  %v575 = vadd.f32 %v544, %v570
  %v576 = vadd.f32 %v545, %v573
  %v578 = vsel %vm261, %v402, 0
  %v581 = vsel %vm261, %v403, 0
  %583 = vmatpush.msra.mxu0 0.0
  %584 = vmatpush.msra.mxu0 0.0
  %585 = vmatpush.msra.mxu0 0.0
  %586 = vmatpush.msra.mxu0 0.0
  %587 = vmatpush.msra.mxu0 0.0
  %588 = vmatpush.msra.mxu0 0.0
  %589 = vmatpush.msra.mxu0 0.0
  %590 = vmatpush.msra.mxu0 0.0
  %591 = vmatpush.msra.mxu0 0.0
  %592 = vmatpush.msra.mxu0 0.0
  %593 = vmatpush.msra.mxu0 0.0
  %594 = vmatpush.msra.mxu0 0.0
  %595 = vmatpush.msra.mxu0 %v73
  %596 = vmatpush.msra.mxu0 %v72
  %597 = vmatpush.msra.mxu0 %v71
  %598 = vmatpush.msra.mxu0 %v70
  %599 = vmatmul.f32.gmra.mxu0 %v578
  %v600 = vpop.f32.mrf.mxu0
  %v601 = vadd.f32 0.0, %v600
  %602 = vmatmul.f32.gmra.mxu0 %v581
  %v603 = vpop.f32.mrf.mxu0
  %v604 = vadd.f32 0.0, %v603
  %605 = vdwg.mxu0
  %v606 = vadd.f32 %v575, %v601
  %v607 = vadd.f32 %v576, %v604
  %v608 = vadd.f32 %v606, %v109
  %v609 = vadd.f32 %v607, %v109
  %v610 = vxor.u32 %v608, 2147483648
  %v611 = vxor.u32 %v609, 2147483648
  %v612 = vmul.f32 %v610, 1.442695
  %v613 = vpow.pop %v612
  %v614 = vmul.f32 %v611, 1.442695
  %v615 = vpow.pop %v614
  %v616 = vadd.f32 %v613, 1.0
  %v617 = vadd.f32 %v615, 1.0
  %v618 = vrcp.pop %v616
  %v619 = vmul.f32 %v616, %v618
  %v620 = vsub.f32 1.0, %v619
  %v621 = vmul.f32 %v618, %v620
  %v622 = vadd.f32 %v618, %v621
  %vm623 = vweird.f32 %v616
  %vm624 = vweird.f32 %v618
  %vm625 = vmor %vm623, %vm624
  %v626 = vsel %vm625, %v618, %v622
  %v627 = vand.u32 2147483647, %v616
  %vm628 = vcmp.eq.f32.partialorder %v627, 8.507059e+37
  %v629 = vand.u32 %v616, 2147483648
  %v630 = vor.u32 1.1754944e-38, %v629
  %v631 = vsel %vm628, %v630, %v626
  %v632 = vmul.f32 1.0, %v631
  %v633 = vrcp.pop %v617
  %v634 = vmul.f32 %v617, %v633
  %v635 = vsub.f32 1.0, %v634
  %v636 = vmul.f32 %v633, %v635
  %v637 = vadd.f32 %v633, %v636
  %vm638 = vweird.f32 %v617
  %vm639 = vweird.f32 %v633
  %vm640 = vmor %vm638, %vm639
  %v641 = vsel %vm640, %v633, %v637
  %v642 = vand.u32 2147483647, %v617
  %vm643 = vcmp.eq.f32.partialorder %v642, 8.507059e+37
  %v644 = vand.u32 %v617, 2147483648
  %v645 = vor.u32 1.1754944e-38, %v644
  %v646 = vsel %vm643, %v645, %v641
  %v647 = vmul.f32 1.0, %v646
  %v648 = vmul.f32 %v537, %v112
  %v649 = vmul.f32 %v542, %v112
  %650 = vmatpush.msra.mxu0 0.0
  %651 = vmatpush.msra.mxu0 0.0
  %652 = vmatpush.msra.mxu0 0.0
  %653 = vmatpush.msra.mxu0 0.0
  %654 = vmatpush.msra.mxu0 0.0
  %655 = vmatpush.msra.mxu0 0.0
  %656 = vmatpush.msra.mxu0 0.0
  %657 = vmatpush.msra.mxu0 0.0
  %658 = vmatpush.msra.mxu0 0.0
  %659 = vmatpush.msra.mxu0 0.0
  %660 = vmatpush.msra.mxu0 0.0
  %661 = vmatpush.msra.mxu0 0.0
  %662 = vmatpush.msra.mxu0 0.0
  %663 = vmatpush.msra.mxu0 0.0
  %664 = vmatpush.msra.mxu0 %v77
  %665 = vmatpush.msra.mxu0 %v76
  %666 = vmatmul.f32.gmra.mxu0 %v547
  %v667 = vpop.f32.mrf.mxu0
  %v668 = vadd.f32 0.0, %v667
  %669 = vmatmul.f32.gmra.mxu0 %v550
  %v670 = vpop.f32.mrf.mxu0
  %v671 = vadd.f32 0.0, %v670
  %672 = vdwg.mxu0
  %v673 = vadd.f32 %v648, %v668
  %v674 = vadd.f32 %v649, %v671
  %675 = vrot.lane.b32.xlu0 %v402, 32
  %v676 = vpop.permute.xlu0 %675
  %677 = vrot.lane.b32.xlu0 %v403, 32
  %v678 = vpop.permute.xlu0 %677
  %v681 = vmul.f32 %v632, %v676
  %v682 = vmul.f32 %v647, %v678
  %685 = vrot.lane.b32.xlu0 %v681, 96
  %v686 = vpop.permute.xlu0 %685
  %687 = vrot.lane.b32.xlu0 %v682, 96
  %v688 = vpop.permute.xlu0 %687
  %v689 = vsel %vm261, %v686, 0
  %v691 = vsel %vm261, %v688, 0
  %693 = vmatpush.msra.mxu0 0.0
  %694 = vmatpush.msra.mxu0 0.0
  %695 = vmatpush.msra.mxu0 0.0
  %696 = vmatpush.msra.mxu0 0.0
  %697 = vmatpush.msra.mxu0 0.0
  %698 = vmatpush.msra.mxu0 0.0
  %699 = vmatpush.msra.mxu0 0.0
  %700 = vmatpush.msra.mxu0 0.0
  %701 = vmatpush.msra.mxu0 0.0
  %702 = vmatpush.msra.mxu0 0.0
  %703 = vmatpush.msra.mxu0 0.0
  %704 = vmatpush.msra.mxu0 0.0
  %705 = vmatpush.msra.mxu0 %v81
  %706 = vmatpush.msra.mxu0 %v80
  %707 = vmatpush.msra.mxu0 %v79
  %708 = vmatpush.msra.mxu0 %v78
  %709 = vmatmul.f32.gmra.mxu0 %v689
  %v710 = vpop.f32.mrf.mxu0
  %v711 = vadd.f32 0.0, %v710
  %712 = vmatmul.f32.gmra.mxu0 %v691
  %v713 = vpop.f32.mrf.mxu0
  %v714 = vadd.f32 0.0, %v713
  %715 = vdwg.mxu0
  %v716 = vadd.f32 %v673, %v711
  %v717 = vadd.f32 %v674, %v714
  %v718 = vadd.f32 %v716, %v115
  %v719 = vadd.f32 %v717, %v115
  %v720 = vtanh.pop %v718
  %v721 = vtanh.pop %v719
  %v722 = vmul.f32 %v632, %v402
  %v723 = vmul.f32 %v647, %v403
  %v724 = vsub.f32 1.0, %v632
  %v725 = vsub.f32 1.0, %v647
  %v726 = vmul.f32 %v724, %v720
  %v727 = vmul.f32 %v725, %v721
  %v728 = vadd.f32 %v722, %v726
  %v729 = vadd.f32 %v723, %v727
  %v730 = vmul.f32 %v728, %v118
  %v731 = vmul.f32 %v729, %v118
  %v732 = vsel %vm261, %v730, 0.0
  %733 = vadd.xlane.f32.xlu0 %v732
  %v734 = vpop.xlane.xlu0 %733
  %v735 = vsel %vm261, %v731, 0.0
  %736 = vadd.xlane.f32.xlu0 %v735
  %v737 = vpop.xlane.xlu0 %736
  %v738 = vadd.f32 %v734, %v121
  %v739 = vadd.f32 %v737, %v121
  %741 = vset.pattern.permute.xlu0 0
  %742 = vperm.xlu0 %741, %v140
  %v743 = vpop.permute.xlu0 %742
  %746 = vset.pattern.permute.xlu0 0
  %747 = vperm.xlu0 %746, %v141
  %v748 = vpop.permute.xlu0 %747
  %v750 = vmul.f32 %v743, %v85
  %v751 = vmul.f32 %v748, %v85
  %752 = vset.pattern.permute.xlu0 1
  %753 = vperm.xlu0 %752, %v140
  %v754 = vpop.permute.xlu0 %753
  %756 = vset.pattern.permute.xlu0 1
  %757 = vperm.xlu0 %756, %v141
  %v758 = vpop.permute.xlu0 %757
  %v760 = vmul.f32 %v754, %v86
  %v761 = vmul.f32 %v758, %v86
  %v762 = vadd.f32 %v750, %v760
  %v763 = vadd.f32 %v751, %v761
  %764 = vset.pattern.permute.xlu0 2
  %765 = vperm.xlu0 %764, %v140
  %v766 = vpop.permute.xlu0 %765
  %768 = vset.pattern.permute.xlu0 2
  %769 = vperm.xlu0 %768, %v141
  %v770 = vpop.permute.xlu0 %769
  %v772 = vmul.f32 %v766, %v87
  %v773 = vmul.f32 %v770, %v87
  %v774 = vadd.f32 %v762, %v772
  %v775 = vadd.f32 %v763, %v773
  %777 = vset.pattern.permute.xlu0 0
  %778 = vperm.xlu0 %777, %v532
  %v779 = vpop.permute.xlu0 %778
  %782 = vset.pattern.permute.xlu0 0
  %783 = vperm.xlu0 %782, %v533
  %v784 = vpop.permute.xlu0 %783
  %v786 = vmul.f32 %v779, %v88
  %v787 = vmul.f32 %v784, %v88
  %788 = vset.pattern.permute.xlu0 1
  %789 = vperm.xlu0 %788, %v532
  %v790 = vpop.permute.xlu0 %789
  %792 = vset.pattern.permute.xlu0 1
  %793 = vperm.xlu0 %792, %v533
  %v794 = vpop.permute.xlu0 %793
  %v796 = vmul.f32 %v790, %v89
  %v797 = vmul.f32 %v794, %v89
  %v798 = vadd.f32 %v786, %v796
  %v799 = vadd.f32 %v787, %v797
  %800 = vset.pattern.permute.xlu0 2
  %801 = vperm.xlu0 %800, %v532
  %v802 = vpop.permute.xlu0 %801
  %804 = vset.pattern.permute.xlu0 2
  %805 = vperm.xlu0 %804, %v533
  %v806 = vpop.permute.xlu0 %805
  %v808 = vmul.f32 %v802, %v90
  %v809 = vmul.f32 %v806, %v90
  %v810 = vadd.f32 %v798, %v808
  %v811 = vadd.f32 %v799, %v809
  %812 = vset.pattern.permute.xlu0 3
  %813 = vperm.xlu0 %812, %v532
  %v814 = vpop.permute.xlu0 %813
  %816 = vset.pattern.permute.xlu0 3
  %817 = vperm.xlu0 %816, %v533
  %v818 = vpop.permute.xlu0 %817
  %v820 = vmul.f32 %v814, %v91
  %v821 = vmul.f32 %v818, %v91
  %v822 = vadd.f32 %v810, %v820
  %v823 = vadd.f32 %v811, %v821
  %v824 = vadd.f32 %v774, %v822
  %v825 = vadd.f32 %v775, %v823
  %v826 = vadd.f32 %v824, %v93
  %v827 = vadd.f32 %v825, %v93
  %v828 = vtanh.pop %v826
  %v829 = vtanh.pop %v827
  %v830 = vmul.f32 %v743, %v95
  %v831 = vmul.f32 %v748, %v95
  %v832 = vmul.f32 %v754, %v96
  %v833 = vmul.f32 %v758, %v96
  %v834 = vadd.f32 %v830, %v832
  %v835 = vadd.f32 %v831, %v833
  %v836 = vmul.f32 %v766, %v97
  %v837 = vmul.f32 %v770, %v97
  %v838 = vadd.f32 %v834, %v836
  %v839 = vadd.f32 %v835, %v837
  %v840 = vmul.f32 %v779, %v98
  %v841 = vmul.f32 %v784, %v98
  %v842 = vmul.f32 %v790, %v99
  %v843 = vmul.f32 %v794, %v99
  %v844 = vadd.f32 %v840, %v842
  %v845 = vadd.f32 %v841, %v843
  %v846 = vmul.f32 %v802, %v100
  %v847 = vmul.f32 %v806, %v100
  %v848 = vadd.f32 %v844, %v846
  %v849 = vadd.f32 %v845, %v847
  %v850 = vmul.f32 %v814, %v101
  %v851 = vmul.f32 %v818, %v101
  %v852 = vadd.f32 %v848, %v850
  %v853 = vadd.f32 %v849, %v851
  %v854 = vadd.f32 %v838, %v852
  %v855 = vadd.f32 %v839, %v853
  %v856 = vadd.f32 %v854, %v103
  %v857 = vadd.f32 %v855, %v103
  %v858 = vtanh.pop %v856
  %v859 = vtanh.pop %v857
  %861 = vset.pattern.permute.xlu0 0
  %862 = vperm.xlu0 %861, %v129
  %v863 = vpop.permute.xlu0 %862
  %866 = vset.pattern.permute.xlu0 0
  %867 = vperm.xlu0 %866, %v130
  %v868 = vpop.permute.xlu0 %867
  %v870 = vmul.f32 %v863, %v106
  %v871 = vmul.f32 %v868, %v106
  %v873 = vsel %vm229, %v828, 0
  %v876 = vsel %vm229, %v829, 0
  %878 = vmatpush.msra.mxu0 0.0
  %879 = vmatpush.msra.mxu0 0.0
  %880 = vmatpush.msra.mxu0 0.0
  %881 = vmatpush.msra.mxu0 0.0
  %882 = vmatpush.msra.mxu0 0.0
  %883 = vmatpush.msra.mxu0 0.0
  %884 = vmatpush.msra.mxu0 0.0
  %885 = vmatpush.msra.mxu0 0.0
  %886 = vmatpush.msra.mxu0 0.0
  %887 = vmatpush.msra.mxu0 0.0
  %888 = vmatpush.msra.mxu0 0.0
  %889 = vmatpush.msra.mxu0 0.0
  %890 = vmatpush.msra.mxu0 0.0
  %891 = vmatpush.msra.mxu0 0.0
  %892 = vmatpush.msra.mxu0 %v69
  %893 = vmatpush.msra.mxu0 %v68
  %894 = vmatmul.f32.gmra.mxu0 %v873
  %v895 = vpop.f32.mrf.mxu0
  %v896 = vadd.f32 0.0, %v895
  %897 = vmatmul.f32.gmra.mxu0 %v876
  %v898 = vpop.f32.mrf.mxu0
  %v899 = vadd.f32 0.0, %v898
  %900 = vdwg.mxu0
  %v901 = vadd.f32 %v870, %v896
  %v902 = vadd.f32 %v871, %v899
  %v904 = vsel %vm261, %v728, 0
  %v907 = vsel %vm261, %v729, 0
  %909 = vmatpush.msra.mxu0 0.0
  %910 = vmatpush.msra.mxu0 0.0
  %911 = vmatpush.msra.mxu0 0.0
  %912 = vmatpush.msra.mxu0 0.0
  %913 = vmatpush.msra.mxu0 0.0
  %914 = vmatpush.msra.mxu0 0.0
  %915 = vmatpush.msra.mxu0 0.0
  %916 = vmatpush.msra.mxu0 0.0
  %917 = vmatpush.msra.mxu0 0.0
  %918 = vmatpush.msra.mxu0 0.0
  %919 = vmatpush.msra.mxu0 0.0
  %920 = vmatpush.msra.mxu0 0.0
  %921 = vmatpush.msra.mxu0 %v73
  %922 = vmatpush.msra.mxu0 %v72
  %923 = vmatpush.msra.mxu0 %v71
  %924 = vmatpush.msra.mxu0 %v70
  %925 = vmatmul.f32.gmra.mxu0 %v904
  %v926 = vpop.f32.mrf.mxu0
  %v927 = vadd.f32 0.0, %v926
  %928 = vmatmul.f32.gmra.mxu0 %v907
  %v929 = vpop.f32.mrf.mxu0
  %v930 = vadd.f32 0.0, %v929
  %931 = vdwg.mxu0
  %v932 = vadd.f32 %v901, %v927
  %v933 = vadd.f32 %v902, %v930
  %v934 = vadd.f32 %v932, %v109
  %v935 = vadd.f32 %v933, %v109
  %v936 = vxor.u32 %v934, 2147483648
  %v937 = vxor.u32 %v935, 2147483648
  %v938 = vmul.f32 %v936, 1.442695
  %v939 = vpow.pop %v938
  %v940 = vmul.f32 %v937, 1.442695
  %v941 = vpow.pop %v940
  %v942 = vadd.f32 %v939, 1.0
  %v943 = vadd.f32 %v941, 1.0
  %v944 = vrcp.pop %v942
  %v945 = vmul.f32 %v942, %v944
  %v946 = vsub.f32 1.0, %v945
  %v947 = vmul.f32 %v944, %v946
  %v948 = vadd.f32 %v944, %v947
  %vm949 = vweird.f32 %v942
  %vm950 = vweird.f32 %v944
  %vm951 = vmor %vm949, %vm950
  %v952 = vsel %vm951, %v944, %v948
  %v953 = vand.u32 2147483647, %v942
  %vm954 = vcmp.eq.f32.partialorder %v953, 8.507059e+37
  %v955 = vand.u32 %v942, 2147483648
  %v956 = vor.u32 1.1754944e-38, %v955
  %v957 = vsel %vm954, %v956, %v952
  %v958 = vmul.f32 1.0, %v957
  %v959 = vrcp.pop %v943
  %v960 = vmul.f32 %v943, %v959
  %v961 = vsub.f32 1.0, %v960
  %v962 = vmul.f32 %v959, %v961
  %v963 = vadd.f32 %v959, %v962
  %vm964 = vweird.f32 %v943
  %vm965 = vweird.f32 %v959
  %vm966 = vmor %vm964, %vm965
  %v967 = vsel %vm966, %v959, %v963
  %v968 = vand.u32 2147483647, %v943
  %vm969 = vcmp.eq.f32.partialorder %v968, 8.507059e+37
  %v970 = vand.u32 %v943, 2147483648
  %v971 = vor.u32 1.1754944e-38, %v970
  %v972 = vsel %vm969, %v971, %v967
  %v973 = vmul.f32 1.0, %v972
  %v974 = vmul.f32 %v863, %v112
  %v975 = vmul.f32 %v868, %v112
  %976 = vmatpush.msra.mxu0 0.0
  %977 = vmatpush.msra.mxu0 0.0
  %978 = vmatpush.msra.mxu0 0.0
  %979 = vmatpush.msra.mxu0 0.0
  %980 = vmatpush.msra.mxu0 0.0
  %981 = vmatpush.msra.mxu0 0.0
  %982 = vmatpush.msra.mxu0 0.0
  %983 = vmatpush.msra.mxu0 0.0
  %984 = vmatpush.msra.mxu0 0.0
  %985 = vmatpush.msra.mxu0 0.0
  %986 = vmatpush.msra.mxu0 0.0
  %987 = vmatpush.msra.mxu0 0.0
  %988 = vmatpush.msra.mxu0 0.0
  %989 = vmatpush.msra.mxu0 0.0
  %990 = vmatpush.msra.mxu0 %v77
  %991 = vmatpush.msra.mxu0 %v76
  %992 = vmatmul.f32.gmra.mxu0 %v873
  %v993 = vpop.f32.mrf.mxu0
  %v994 = vadd.f32 0.0, %v993
  %995 = vmatmul.f32.gmra.mxu0 %v876
  %v996 = vpop.f32.mrf.mxu0
  %v997 = vadd.f32 0.0, %v996
  %998 = vdwg.mxu0
  %v999 = vadd.f32 %v974, %v994
  %v1000 = vadd.f32 %v975, %v997
  %1001 = vrot.lane.b32.xlu0 %v728, 32
  %v1002 = vpop.permute.xlu0 %1001
  %1003 = vrot.lane.b32.xlu0 %v729, 32
  %v1004 = vpop.permute.xlu0 %1003
  %v1007 = vmul.f32 %v958, %v1002
  %v1008 = vmul.f32 %v973, %v1004
  %1011 = vrot.lane.b32.xlu0 %v1007, 96
  %v1012 = vpop.permute.xlu0 %1011
  %1013 = vrot.lane.b32.xlu0 %v1008, 96
  %v1014 = vpop.permute.xlu0 %1013
  %v1015 = vsel %vm261, %v1012, 0
  %v1017 = vsel %vm261, %v1014, 0
  %1019 = vmatpush.msra.mxu0 0.0
  %1020 = vmatpush.msra.mxu0 0.0
  %1021 = vmatpush.msra.mxu0 0.0
  %1022 = vmatpush.msra.mxu0 0.0
  %1023 = vmatpush.msra.mxu0 0.0
  %1024 = vmatpush.msra.mxu0 0.0
  %1025 = vmatpush.msra.mxu0 0.0
  %1026 = vmatpush.msra.mxu0 0.0
  %1027 = vmatpush.msra.mxu0 0.0
  %1028 = vmatpush.msra.mxu0 0.0
  %1029 = vmatpush.msra.mxu0 0.0
  %1030 = vmatpush.msra.mxu0 0.0
  %1031 = vmatpush.msra.mxu0 %v81
  %1032 = vmatpush.msra.mxu0 %v80
  %1033 = vmatpush.msra.mxu0 %v79
  %1034 = vmatpush.msra.mxu0 %v78
  %1035 = vmatmul.f32.gmra.mxu0 %v1015
  %v1036 = vpop.f32.mrf.mxu0
  %v1037 = vadd.f32 0.0, %v1036
  %1038 = vmatmul.f32.gmra.mxu0 %v1017
  %v1039 = vpop.f32.mrf.mxu0
  %v1040 = vadd.f32 0.0, %v1039
  %1041 = vdwg.mxu0
  %v1042 = vadd.f32 %v999, %v1037
  %v1043 = vadd.f32 %v1000, %v1040
  %v1044 = vadd.f32 %v1042, %v115
  %v1045 = vadd.f32 %v1043, %v115
  %v1046 = vtanh.pop %v1044
  %v1047 = vtanh.pop %v1045
  %v1048 = vmul.f32 %v958, %v728
  %v1049 = vmul.f32 %v973, %v729
  %v1050 = vsub.f32 1.0, %v958
  %v1051 = vsub.f32 1.0, %v973
  %v1052 = vmul.f32 %v1050, %v1046
  %v1053 = vmul.f32 %v1051, %v1047
  %v1054 = vadd.f32 %v1048, %v1052
  %v1055 = vadd.f32 %v1049, %v1053
  %v1056 = vmul.f32 %v1054, %v118
  %v1057 = vmul.f32 %v1055, %v118
  %v1058 = vsel %vm261, %v1056, 0.0
  %1059 = vadd.xlane.f32.xlu0 %v1058
  %v1060 = vpop.xlane.xlu0 %1059
  %v1061 = vsel %vm261, %v1057, 0.0
  %1062 = vadd.xlane.f32.xlu0 %v1061
  %v1063 = vpop.xlane.xlu0 %1062
  %v1064 = vadd.f32 %v1060, %v121
  %v1065 = vadd.f32 %v1063, %v121
  %1067 = vset.pattern.permute.xlu0 0
  %1068 = vperm.xlu0 %1067, %v143
  %v1069 = vpop.permute.xlu0 %1068
  %1072 = vset.pattern.permute.xlu0 0
  %1073 = vperm.xlu0 %1072, %v144
  %v1074 = vpop.permute.xlu0 %1073
  %v1076 = vmul.f32 %v1069, %v85
  %v1077 = vmul.f32 %v1074, %v85
  %1078 = vset.pattern.permute.xlu0 1
  %1079 = vperm.xlu0 %1078, %v143
  %v1080 = vpop.permute.xlu0 %1079
  %1082 = vset.pattern.permute.xlu0 1
  %1083 = vperm.xlu0 %1082, %v144
  %v1084 = vpop.permute.xlu0 %1083
  %v1086 = vmul.f32 %v1080, %v86
  %v1087 = vmul.f32 %v1084, %v86
  %v1088 = vadd.f32 %v1076, %v1086
  %v1089 = vadd.f32 %v1077, %v1087
  %1090 = vset.pattern.permute.xlu0 2
  %1091 = vperm.xlu0 %1090, %v143
  %v1092 = vpop.permute.xlu0 %1091
  %1094 = vset.pattern.permute.xlu0 2
  %1095 = vperm.xlu0 %1094, %v144
  %v1096 = vpop.permute.xlu0 %1095
  %v1098 = vmul.f32 %v1092, %v87
  %v1099 = vmul.f32 %v1096, %v87
  %v1100 = vadd.f32 %v1088, %v1098
  %v1101 = vadd.f32 %v1089, %v1099
  %1103 = vset.pattern.permute.xlu0 0
  %1104 = vperm.xlu0 %1103, %v858
  %v1105 = vpop.permute.xlu0 %1104
  %1108 = vset.pattern.permute.xlu0 0
  %1109 = vperm.xlu0 %1108, %v859
  %v1110 = vpop.permute.xlu0 %1109
  %v1112 = vmul.f32 %v1105, %v88
  %v1113 = vmul.f32 %v1110, %v88
  %1114 = vset.pattern.permute.xlu0 1
  %1115 = vperm.xlu0 %1114, %v858
  %v1116 = vpop.permute.xlu0 %1115
  %1118 = vset.pattern.permute.xlu0 1
  %1119 = vperm.xlu0 %1118, %v859
  %v1120 = vpop.permute.xlu0 %1119
  %v1122 = vmul.f32 %v1116, %v89
  %v1123 = vmul.f32 %v1120, %v89
  %v1124 = vadd.f32 %v1112, %v1122
  %v1125 = vadd.f32 %v1113, %v1123
  %1126 = vset.pattern.permute.xlu0 2
  %1127 = vperm.xlu0 %1126, %v858
  %v1128 = vpop.permute.xlu0 %1127
  %1130 = vset.pattern.permute.xlu0 2
  %1131 = vperm.xlu0 %1130, %v859
  %v1132 = vpop.permute.xlu0 %1131
  %v1134 = vmul.f32 %v1128, %v90
  %v1135 = vmul.f32 %v1132, %v90
  %v1136 = vadd.f32 %v1124, %v1134
  %v1137 = vadd.f32 %v1125, %v1135
  %1138 = vset.pattern.permute.xlu0 3
  %1139 = vperm.xlu0 %1138, %v858
  %v1140 = vpop.permute.xlu0 %1139
  %1142 = vset.pattern.permute.xlu0 3
  %1143 = vperm.xlu0 %1142, %v859
  %v1144 = vpop.permute.xlu0 %1143
  %v1146 = vmul.f32 %v1140, %v91
  %v1147 = vmul.f32 %v1144, %v91
  %v1148 = vadd.f32 %v1136, %v1146
  %v1149 = vadd.f32 %v1137, %v1147
  %v1150 = vadd.f32 %v1100, %v1148
  %v1151 = vadd.f32 %v1101, %v1149
  %v1152 = vadd.f32 %v1150, %v93
  %v1153 = vadd.f32 %v1151, %v93
  %v1154 = vtanh.pop %v1152
  %v1155 = vtanh.pop %v1153
  %v1156 = vmul.f32 %v1069, %v95
  %v1157 = vmul.f32 %v1074, %v95
  %v1158 = vmul.f32 %v1080, %v96
  %v1159 = vmul.f32 %v1084, %v96
  %v1160 = vadd.f32 %v1156, %v1158
  %v1161 = vadd.f32 %v1157, %v1159
  %v1162 = vmul.f32 %v1092, %v97
  %v1163 = vmul.f32 %v1096, %v97
  %v1164 = vadd.f32 %v1160, %v1162
  %v1165 = vadd.f32 %v1161, %v1163
  %v1166 = vmul.f32 %v1105, %v98
  %v1167 = vmul.f32 %v1110, %v98
  %v1168 = vmul.f32 %v1116, %v99
  %v1169 = vmul.f32 %v1120, %v99
  %v1170 = vadd.f32 %v1166, %v1168
  %v1171 = vadd.f32 %v1167, %v1169
  %v1172 = vmul.f32 %v1128, %v100
  %v1173 = vmul.f32 %v1132, %v100
  %v1174 = vadd.f32 %v1170, %v1172
  %v1175 = vadd.f32 %v1171, %v1173
  %v1176 = vmul.f32 %v1140, %v101
  %v1177 = vmul.f32 %v1144, %v101
  %v1178 = vadd.f32 %v1174, %v1176
  %v1179 = vadd.f32 %v1175, %v1177
  %v1180 = vadd.f32 %v1164, %v1178
  %v1181 = vadd.f32 %v1165, %v1179
  %v1182 = vadd.f32 %v1180, %v103
  %v1183 = vadd.f32 %v1181, %v103
  %v1184 = vtanh.pop %v1182
  %v1185 = vtanh.pop %v1183
  %1187 = vset.pattern.permute.xlu0 0
  %1188 = vperm.xlu0 %1187, %v132
  %v1189 = vpop.permute.xlu0 %1188
  %1192 = vset.pattern.permute.xlu0 0
  %1193 = vperm.xlu0 %1192, %v133
  %v1194 = vpop.permute.xlu0 %1193
  %v1196 = vmul.f32 %v1189, %v106
  %v1197 = vmul.f32 %v1194, %v106
  %v1199 = vsel %vm229, %v1154, 0
  %v1202 = vsel %vm229, %v1155, 0
  %1204 = vmatpush.msra.mxu0 0.0
  %1205 = vmatpush.msra.mxu0 0.0
  %1206 = vmatpush.msra.mxu0 0.0
  %1207 = vmatpush.msra.mxu0 0.0
  %1208 = vmatpush.msra.mxu0 0.0
  %1209 = vmatpush.msra.mxu0 0.0
  %1210 = vmatpush.msra.mxu0 0.0
  %1211 = vmatpush.msra.mxu0 0.0
  %1212 = vmatpush.msra.mxu0 0.0
  %1213 = vmatpush.msra.mxu0 0.0
  %1214 = vmatpush.msra.mxu0 0.0
  %1215 = vmatpush.msra.mxu0 0.0
  %1216 = vmatpush.msra.mxu0 0.0
  %1217 = vmatpush.msra.mxu0 0.0
  %1218 = vmatpush.msra.mxu0 %v69
  %1219 = vmatpush.msra.mxu0 %v68
  %1220 = vmatmul.f32.gmra.mxu0 %v1199
  %v1221 = vpop.f32.mrf.mxu0
  %v1222 = vadd.f32 0.0, %v1221
  %1223 = vmatmul.f32.gmra.mxu0 %v1202
  %v1224 = vpop.f32.mrf.mxu0
  %v1225 = vadd.f32 0.0, %v1224
  %1226 = vdwg.mxu0
  %v1227 = vadd.f32 %v1196, %v1222
  %v1228 = vadd.f32 %v1197, %v1225
  %v1230 = vsel %vm261, %v1054, 0
  %v1233 = vsel %vm261, %v1055, 0
  %1235 = vmatpush.msra.mxu0 0.0
  %1236 = vmatpush.msra.mxu0 0.0
  %1237 = vmatpush.msra.mxu0 0.0
  %1238 = vmatpush.msra.mxu0 0.0
  %1239 = vmatpush.msra.mxu0 0.0
  %1240 = vmatpush.msra.mxu0 0.0
  %1241 = vmatpush.msra.mxu0 0.0
  %1242 = vmatpush.msra.mxu0 0.0
  %1243 = vmatpush.msra.mxu0 0.0
  %1244 = vmatpush.msra.mxu0 0.0
  %1245 = vmatpush.msra.mxu0 0.0
  %1246 = vmatpush.msra.mxu0 0.0
  %1247 = vmatpush.msra.mxu0 %v73
  %1248 = vmatpush.msra.mxu0 %v72
  %1249 = vmatpush.msra.mxu0 %v71
  %1250 = vmatpush.msra.mxu0 %v70
  %1251 = vmatmul.f32.gmra.mxu0 %v1230
  %v1252 = vpop.f32.mrf.mxu0
  %v1253 = vadd.f32 0.0, %v1252
  %1254 = vmatmul.f32.gmra.mxu0 %v1233
  %v1255 = vpop.f32.mrf.mxu0
  %v1256 = vadd.f32 0.0, %v1255
  %1257 = vdwg.mxu0
  %v1258 = vadd.f32 %v1227, %v1253
  %v1259 = vadd.f32 %v1228, %v1256
  %v1260 = vadd.f32 %v1258, %v109
  %v1261 = vadd.f32 %v1259, %v109
  %v1262 = vxor.u32 %v1260, 2147483648
  %v1263 = vxor.u32 %v1261, 2147483648
  %v1264 = vmul.f32 %v1262, 1.442695
  %v1265 = vpow.pop %v1264
  %v1266 = vmul.f32 %v1263, 1.442695
  %v1267 = vpow.pop %v1266
  %v1268 = vadd.f32 %v1265, 1.0
  %v1269 = vadd.f32 %v1267, 1.0
  %v1270 = vrcp.pop %v1268
  %v1271 = vmul.f32 %v1268, %v1270
  %v1272 = vsub.f32 1.0, %v1271
  %v1273 = vmul.f32 %v1270, %v1272
  %v1274 = vadd.f32 %v1270, %v1273
  %vm1275 = vweird.f32 %v1268
  %vm1276 = vweird.f32 %v1270
  %vm1277 = vmor %vm1275, %vm1276
  %v1278 = vsel %vm1277, %v1270, %v1274
  %v1279 = vand.u32 2147483647, %v1268
  %vm1280 = vcmp.eq.f32.partialorder %v1279, 8.507059e+37
  %v1281 = vand.u32 %v1268, 2147483648
  %v1282 = vor.u32 1.1754944e-38, %v1281
  %v1283 = vsel %vm1280, %v1282, %v1278
  %v1284 = vmul.f32 1.0, %v1283
  %v1285 = vrcp.pop %v1269
  %v1286 = vmul.f32 %v1269, %v1285
  %v1287 = vsub.f32 1.0, %v1286
  %v1288 = vmul.f32 %v1285, %v1287
  %v1289 = vadd.f32 %v1285, %v1288
  %vm1290 = vweird.f32 %v1269
  %vm1291 = vweird.f32 %v1285
  %vm1292 = vmor %vm1290, %vm1291
  %v1293 = vsel %vm1292, %v1285, %v1289
  %v1294 = vand.u32 2147483647, %v1269
  %vm1295 = vcmp.eq.f32.partialorder %v1294, 8.507059e+37
  %v1296 = vand.u32 %v1269, 2147483648
  %v1297 = vor.u32 1.1754944e-38, %v1296
  %v1298 = vsel %vm1295, %v1297, %v1293
  %v1299 = vmul.f32 1.0, %v1298
  %v1300 = vmul.f32 %v1189, %v112
  %v1301 = vmul.f32 %v1194, %v112
  %1302 = vmatpush.msra.mxu0 0.0
  %1303 = vmatpush.msra.mxu0 0.0
  %1304 = vmatpush.msra.mxu0 0.0
  %1305 = vmatpush.msra.mxu0 0.0
  %1306 = vmatpush.msra.mxu0 0.0
  %1307 = vmatpush.msra.mxu0 0.0
  %1308 = vmatpush.msra.mxu0 0.0
  %1309 = vmatpush.msra.mxu0 0.0
  %1310 = vmatpush.msra.mxu0 0.0
  %1311 = vmatpush.msra.mxu0 0.0
  %1312 = vmatpush.msra.mxu0 0.0
  %1313 = vmatpush.msra.mxu0 0.0
  %1314 = vmatpush.msra.mxu0 0.0
  %1315 = vmatpush.msra.mxu0 0.0
  %1316 = vmatpush.msra.mxu0 %v77
  %1317 = vmatpush.msra.mxu0 %v76
  %1318 = vmatmul.f32.gmra.mxu0 %v1199
  %v1319 = vpop.f32.mrf.mxu0
  %v1320 = vadd.f32 0.0, %v1319
  %1321 = vmatmul.f32.gmra.mxu0 %v1202
  %v1322 = vpop.f32.mrf.mxu0
  %v1323 = vadd.f32 0.0, %v1322
  %1324 = vdwg.mxu0
  %v1325 = vadd.f32 %v1300, %v1320
  %v1326 = vadd.f32 %v1301, %v1323
  %1327 = vrot.lane.b32.xlu0 %v1054, 32
  %v1328 = vpop.permute.xlu0 %1327
  %1329 = vrot.lane.b32.xlu0 %v1055, 32
  %v1330 = vpop.permute.xlu0 %1329
  %v1333 = vmul.f32 %v1284, %v1328
  %v1334 = vmul.f32 %v1299, %v1330
  %1337 = vrot.lane.b32.xlu0 %v1333, 96
  %v1338 = vpop.permute.xlu0 %1337
  %1339 = vrot.lane.b32.xlu0 %v1334, 96
  %v1340 = vpop.permute.xlu0 %1339
  %v1341 = vsel %vm261, %v1338, 0
  %v1343 = vsel %vm261, %v1340, 0
  %1345 = vmatpush.msra.mxu0 0.0
  %1346 = vmatpush.msra.mxu0 0.0
  %1347 = vmatpush.msra.mxu0 0.0
  %1348 = vmatpush.msra.mxu0 0.0
  %1349 = vmatpush.msra.mxu0 0.0
  %1350 = vmatpush.msra.mxu0 0.0
  %1351 = vmatpush.msra.mxu0 0.0
  %1352 = vmatpush.msra.mxu0 0.0
  %1353 = vmatpush.msra.mxu0 0.0
  %1354 = vmatpush.msra.mxu0 0.0
  %1355 = vmatpush.msra.mxu0 0.0
  %1356 = vmatpush.msra.mxu0 0.0
  %1357 = vmatpush.msra.mxu0 %v81
  %1358 = vmatpush.msra.mxu0 %v80
  %1359 = vmatpush.msra.mxu0 %v79
  %1360 = vmatpush.msra.mxu0 %v78
  %1361 = vmatmul.f32.gmra.mxu0 %v1341
  %v1362 = vpop.f32.mrf.mxu0
  %v1363 = vadd.f32 0.0, %v1362
  %1364 = vmatmul.f32.gmra.mxu0 %v1343
  %v1365 = vpop.f32.mrf.mxu0
  %v1366 = vadd.f32 0.0, %v1365
  %1367 = vdwg.mxu0
  %v1368 = vadd.f32 %v1325, %v1363
  %v1369 = vadd.f32 %v1326, %v1366
  %v1370 = vadd.f32 %v1368, %v115
  %v1371 = vadd.f32 %v1369, %v115
  %v1372 = vtanh.pop %v1370
  %v1373 = vtanh.pop %v1371
  %v1374 = vmul.f32 %v1284, %v1054
  %v1375 = vmul.f32 %v1299, %v1055
  %v1376 = vsub.f32 1.0, %v1284
  %v1377 = vsub.f32 1.0, %v1299
  %v1378 = vmul.f32 %v1376, %v1372
  %v1379 = vmul.f32 %v1377, %v1373
  %v1380 = vadd.f32 %v1374, %v1378
  %v1381 = vadd.f32 %v1375, %v1379
  %v1382 = vmul.f32 %v1380, %v118
  %v1383 = vmul.f32 %v1381, %v118
  %v1384 = vsel %vm261, %v1382, 0.0
  %1385 = vadd.xlane.f32.xlu0 %v1384
  %v1386 = vpop.xlane.xlu0 %1385
  %v1387 = vsel %vm261, %v1383, 0.0
  %1388 = vadd.xlane.f32.xlu0 %v1387
  %v1389 = vpop.xlane.xlu0 %1388
  %v1390 = vadd.f32 %v1386, %v121
  %v1391 = vadd.f32 %v1389, %v121
  %vm1392 = vcmask 7168
  %1393 = vst.msk [vmem:[%s18] sm:$0xff] %vm1392, %v412
  %1394 = vst.msk [vmem:[%s18 + $0x8] sm:$0xff] %vm1392, %v413
  %1397 = vrot.lane.b32.xlu0 %v738, 1
  %v1398 = vpop.permute.xlu0 %1397
  %1399 = vrot.lane.b32.xlu0 %v739, 1
  %v1400 = vpop.permute.xlu0 %1399
  %vm1403 = vcmask 15368
  %1404 = vst.msk [vmem:[%s18] sm:$0xff] %vm1403, %v1398
  %1405 = vst.msk [vmem:[%s18 + $0x8] sm:$0xff] %vm1403, %v1400
  %1408 = vrot.lane.b32.xlu0 %v1064, 2
  %v1409 = vpop.permute.xlu0 %1408
  %1410 = vrot.lane.b32.xlu0 %v1065, 2
  %v1411 = vpop.permute.xlu0 %1410
  %vm1414 = vcmask 23568
  %1415 = vst.msk [vmem:[%s18] sm:$0xff] %vm1414, %v1409
  %1416 = vst.msk [vmem:[%s18 + $0x8] sm:$0xff] %vm1414, %v1411
  %1419 = vrot.lane.b32.xlu0 %v1390, 3
  %v1420 = vpop.permute.xlu0 %1419
  %1421 = vrot.lane.b32.xlu0 %v1391, 3
  %v1422 = vpop.permute.xlu0 %1421
  %vm1425 = vcmask 31768
  %1426 = vst.msk [vmem:[%s18] sm:$0xff] %vm1425, %v1420
  %1427 = vst.msk [vmem:[%s18 + $0x8] sm:$0xff] %vm1425, %v1422
  %v1428 = vmul.f32 %v1080, %v85
  %v1429 = vmul.f32 %v1084, %v85
  %v1430 = vmul.f32 %v1092, %v86
  %v1431 = vmul.f32 %v1096, %v86
  %v1432 = vadd.f32 %v1428, %v1430
  %v1433 = vadd.f32 %v1429, %v1431
  %1434 = vset.pattern.permute.xlu0 0
  %1435 = vperm.xlu0 %1434, %v1390
  %v1436 = vpop.permute.xlu0 %1435
  %1438 = vset.pattern.permute.xlu0 0
  %1439 = vperm.xlu0 %1438, %v1391
  %v1440 = vpop.permute.xlu0 %1439
  %v1442 = vmul.f32 %v1436, %v87
  %v1443 = vmul.f32 %v1440, %v87
  %v1444 = vadd.f32 %v1432, %v1442
  %v1445 = vadd.f32 %v1433, %v1443
  %1447 = vset.pattern.permute.xlu0 0
  %1448 = vperm.xlu0 %1447, %v1184
  %v1449 = vpop.permute.xlu0 %1448
  %1452 = vset.pattern.permute.xlu0 0
  %1453 = vperm.xlu0 %1452, %v1185
  %v1454 = vpop.permute.xlu0 %1453
  %v1456 = vmul.f32 %v1449, %v88
  %v1457 = vmul.f32 %v1454, %v88
  %1458 = vset.pattern.permute.xlu0 1
  %1459 = vperm.xlu0 %1458, %v1184
  %v1460 = vpop.permute.xlu0 %1459
  %1462 = vset.pattern.permute.xlu0 1
  %1463 = vperm.xlu0 %1462, %v1185
  %v1464 = vpop.permute.xlu0 %1463
  %v1466 = vmul.f32 %v1460, %v89
  %v1467 = vmul.f32 %v1464, %v89
  %v1468 = vadd.f32 %v1456, %v1466
  %v1469 = vadd.f32 %v1457, %v1467
  %1470 = vset.pattern.permute.xlu0 2
  %1471 = vperm.xlu0 %1470, %v1184
  %v1472 = vpop.permute.xlu0 %1471
  %1474 = vset.pattern.permute.xlu0 2
  %1475 = vperm.xlu0 %1474, %v1185
  %v1476 = vpop.permute.xlu0 %1475
  %v1478 = vmul.f32 %v1472, %v90
  %v1479 = vmul.f32 %v1476, %v90
  %v1480 = vadd.f32 %v1468, %v1478
  %v1481 = vadd.f32 %v1469, %v1479
  %1482 = vset.pattern.permute.xlu0 3
  %1483 = vperm.xlu0 %1482, %v1184
  %v1484 = vpop.permute.xlu0 %1483
  %1486 = vset.pattern.permute.xlu0 3
  %1487 = vperm.xlu0 %1486, %v1185
  %v1488 = vpop.permute.xlu0 %1487
  %v1490 = vmul.f32 %v1484, %v91
  %v1491 = vmul.f32 %v1488, %v91
  %v1492 = vadd.f32 %v1480, %v1490
  %v1493 = vadd.f32 %v1481, %v1491
  %v1494 = vadd.f32 %v1444, %v1492
  %v1495 = vadd.f32 %v1445, %v1493
  %v1496 = vadd.f32 %v1494, %v93
  %v1497 = vadd.f32 %v1495, %v93
  %v1498 = vtanh.pop %v1496
  %v1499 = vtanh.pop %v1497
  %v1500 = vmul.f32 %v1436, %v106
  %v1501 = vmul.f32 %v1440, %v106
  %v1503 = vsel %vm229, %v1498, 0
  %v1506 = vsel %vm229, %v1499, 0
  %1508 = vmatpush.msra.mxu0 0.0
  %1509 = vmatpush.msra.mxu0 0.0
  %1510 = vmatpush.msra.mxu0 0.0
  %1511 = vmatpush.msra.mxu0 0.0
  %1512 = vmatpush.msra.mxu0 0.0
  %1513 = vmatpush.msra.mxu0 0.0
  %1514 = vmatpush.msra.mxu0 0.0
  %1515 = vmatpush.msra.mxu0 0.0
  %1516 = vmatpush.msra.mxu0 0.0
  %1517 = vmatpush.msra.mxu0 0.0
  %1518 = vmatpush.msra.mxu0 0.0
  %1519 = vmatpush.msra.mxu0 0.0
  %1520 = vmatpush.msra.mxu0 0.0
  %1521 = vmatpush.msra.mxu0 0.0
  %1522 = vmatpush.msra.mxu0 %v69
  %1523 = vmatpush.msra.mxu0 %v68
  %1524 = vmatmul.f32.gmra.mxu0 %v1503
  %v1525 = vpop.f32.mrf.mxu0
  %v1526 = vadd.f32 0.0, %v1525
  %1527 = vmatmul.f32.gmra.mxu0 %v1506
  %v1528 = vpop.f32.mrf.mxu0
  %v1529 = vadd.f32 0.0, %v1528
  %1530 = vdwg.mxu0
  %v1531 = vadd.f32 %v1500, %v1526
  %v1532 = vadd.f32 %v1501, %v1529
  %v1534 = vsel %vm261, %v1380, 0
  %v1537 = vsel %vm261, %v1381, 0
  %1539 = vmatpush.msra.mxu0 0.0
  %1540 = vmatpush.msra.mxu0 0.0
  %1541 = vmatpush.msra.mxu0 0.0
  %1542 = vmatpush.msra.mxu0 0.0
  %1543 = vmatpush.msra.mxu0 0.0
  %1544 = vmatpush.msra.mxu0 0.0
  %1545 = vmatpush.msra.mxu0 0.0
  %1546 = vmatpush.msra.mxu0 0.0
  %1547 = vmatpush.msra.mxu0 0.0
  %1548 = vmatpush.msra.mxu0 0.0
  %1549 = vmatpush.msra.mxu0 0.0
  %1550 = vmatpush.msra.mxu0 0.0
  %1551 = vmatpush.msra.mxu0 %v73
  %1552 = vmatpush.msra.mxu0 %v72
  %1553 = vmatpush.msra.mxu0 %v71
  %1554 = vmatpush.msra.mxu0 %v70
  %1555 = vmatmul.f32.gmra.mxu0 %v1534
  %v1556 = vpop.f32.mrf.mxu0
  %v1557 = vadd.f32 0.0, %v1556
  %1558 = vmatmul.f32.gmra.mxu0 %v1537
  %v1559 = vpop.f32.mrf.mxu0
  %v1560 = vadd.f32 0.0, %v1559
  %1561 = vdwg.mxu0
  %v1562 = vadd.f32 %v1531, %v1557
  %v1563 = vadd.f32 %v1532, %v1560
  %v1564 = vadd.f32 %v1562, %v109
  %v1565 = vadd.f32 %v1563, %v109
  %v1566 = vxor.u32 %v1564, 2147483648
  %v1567 = vxor.u32 %v1565, 2147483648
  %v1568 = vmul.f32 %v1566, 1.442695
  %v1569 = vpow.pop %v1568
  %v1570 = vmul.f32 %v1567, 1.442695
  %v1571 = vpow.pop %v1570
  %v1572 = vadd.f32 %v1569, 1.0
  %v1573 = vadd.f32 %v1571, 1.0
  %v1574 = vrcp.pop %v1572
  %v1575 = vmul.f32 %v1572, %v1574
  %v1576 = vsub.f32 1.0, %v1575
  %v1577 = vmul.f32 %v1574, %v1576
  %v1578 = vadd.f32 %v1574, %v1577
  %vm1579 = vweird.f32 %v1572
  %vm1580 = vweird.f32 %v1574
  %vm1581 = vmor %vm1579, %vm1580
  %v1582 = vsel %vm1581, %v1574, %v1578
  %v1583 = vand.u32 2147483647, %v1572
  %vm1584 = vcmp.eq.f32.partialorder %v1583, 8.507059e+37
  %v1585 = vand.u32 %v1572, 2147483648
  %v1586 = vor.u32 1.1754944e-38, %v1585
  %v1587 = vsel %vm1584, %v1586, %v1582
  %v1588 = vmul.f32 1.0, %v1587
  %v1589 = vrcp.pop %v1573
  %v1590 = vmul.f32 %v1573, %v1589
  %v1591 = vsub.f32 1.0, %v1590
  %v1592 = vmul.f32 %v1589, %v1591
  %v1593 = vadd.f32 %v1589, %v1592
  %vm1594 = vweird.f32 %v1573
  %vm1595 = vweird.f32 %v1589
  %vm1596 = vmor %vm1594, %vm1595
  %v1597 = vsel %vm1596, %v1589, %v1593
  %v1598 = vand.u32 2147483647, %v1573
  %vm1599 = vcmp.eq.f32.partialorder %v1598, 8.507059e+37
  %v1600 = vand.u32 %v1573, 2147483648
  %v1601 = vor.u32 1.1754944e-38, %v1600
  %v1602 = vsel %vm1599, %v1601, %v1597
  %v1603 = vmul.f32 1.0, %v1602
  %v1604 = vmul.f32 %v1436, %v112
  %v1605 = vmul.f32 %v1440, %v112
  %1606 = vmatpush.msra.mxu0 0.0
  %1607 = vmatpush.msra.mxu0 0.0
  %1608 = vmatpush.msra.mxu0 0.0
  %1609 = vmatpush.msra.mxu0 0.0
  %1610 = vmatpush.msra.mxu0 0.0
  %1611 = vmatpush.msra.mxu0 0.0
  %1612 = vmatpush.msra.mxu0 0.0
  %1613 = vmatpush.msra.mxu0 0.0
  %1614 = vmatpush.msra.mxu0 0.0
  %1615 = vmatpush.msra.mxu0 0.0
  %1616 = vmatpush.msra.mxu0 0.0
  %1617 = vmatpush.msra.mxu0 0.0
  %1618 = vmatpush.msra.mxu0 0.0
  %1619 = vmatpush.msra.mxu0 0.0
  %1620 = vmatpush.msra.mxu0 %v77
  %1621 = vmatpush.msra.mxu0 %v76
  %1622 = vmatmul.f32.gmra.mxu0 %v1503
  %v1623 = vpop.f32.mrf.mxu0
  %v1624 = vadd.f32 0.0, %v1623
  %1625 = vmatmul.f32.gmra.mxu0 %v1506
  %v1626 = vpop.f32.mrf.mxu0
  %v1627 = vadd.f32 0.0, %v1626
  %1628 = vdwg.mxu0
  %v1629 = vadd.f32 %v1604, %v1624
  %v1630 = vadd.f32 %v1605, %v1627
  %1631 = vrot.lane.b32.xlu0 %v1380, 32
  %v1632 = vpop.permute.xlu0 %1631
  %1633 = vrot.lane.b32.xlu0 %v1381, 32
  %v1634 = vpop.permute.xlu0 %1633
  %v1637 = vmul.f32 %v1588, %v1632
  %v1638 = vmul.f32 %v1603, %v1634
  %1641 = vrot.lane.b32.xlu0 %v1637, 96
  %v1642 = vpop.permute.xlu0 %1641
  %1643 = vrot.lane.b32.xlu0 %v1638, 96
  %v1644 = vpop.permute.xlu0 %1643
  %v1645 = vsel %vm261, %v1642, 0
  %v1647 = vsel %vm261, %v1644, 0
  %1649 = vmatpush.msra.mxu0 0.0
  %1650 = vmatpush.msra.mxu0 0.0
  %1651 = vmatpush.msra.mxu0 0.0
  %1652 = vmatpush.msra.mxu0 0.0
  %1653 = vmatpush.msra.mxu0 0.0
  %1654 = vmatpush.msra.mxu0 0.0
  %1655 = vmatpush.msra.mxu0 0.0
  %1656 = vmatpush.msra.mxu0 0.0
  %1657 = vmatpush.msra.mxu0 0.0
  %1658 = vmatpush.msra.mxu0 0.0
  %1659 = vmatpush.msra.mxu0 0.0
  %1660 = vmatpush.msra.mxu0 0.0
  %1661 = vmatpush.msra.mxu0 %v81
  %1662 = vmatpush.msra.mxu0 %v80
  %1663 = vmatpush.msra.mxu0 %v79
  %1664 = vmatpush.msra.mxu0 %v78
  %1665 = vmatmul.f32.gmra.mxu0 %v1645
  %v1666 = vpop.f32.mrf.mxu0
  %v1667 = vadd.f32 0.0, %v1666
  %1668 = vmatmul.f32.gmra.mxu0 %v1647
  %v1669 = vpop.f32.mrf.mxu0
  %v1670 = vadd.f32 0.0, %v1669
  %1671 = vdwg.mxu0
  %v1672 = vadd.f32 %v1629, %v1667
  %v1673 = vadd.f32 %v1630, %v1670
  %v1674 = vadd.f32 %v1672, %v115
  %v1675 = vadd.f32 %v1673, %v115
  %v1676 = vtanh.pop %v1674
  %v1677 = vtanh.pop %v1675
  %v1678 = vmul.f32 %v1588, %v1380
  %v1679 = vmul.f32 %v1603, %v1381
  %v1680 = vsub.f32 1.0, %v1588
  %v1681 = vsub.f32 1.0, %v1603
  %v1682 = vmul.f32 %v1680, %v1676
  %v1683 = vmul.f32 %v1681, %v1677
  %v1684 = vadd.f32 %v1678, %v1682
  %v1685 = vadd.f32 %v1679, %v1683
  %v1686 = vmul.f32 %v1684, %v118
  %v1687 = vmul.f32 %v1685, %v118
  %v1688 = vsel %vm261, %v1686, 0.0
  %1689 = vadd.xlane.f32.xlu0 %v1688
  %v1690 = vpop.xlane.xlu0 %1689
  %v1691 = vsel %vm261, %v1687, 0.0
  %1692 = vadd.xlane.f32.xlu0 %v1691
  %v1693 = vpop.xlane.xlu0 %1692
  %v1694 = vadd.f32 %v1690, %v121
  %v1695 = vadd.f32 %v1693, %v121
  %1698 = vrot.lane.b32.xlu0 %v1694, 4
  %v1699 = vpop.permute.xlu0 %1698
  %1700 = vrot.lane.b32.xlu0 %v1695, 4
  %v1701 = vpop.permute.xlu0 %1700
  %vm1704 = vcmask 39968
  %1705 = vst.msk [vmem:[%s18] sm:$0xff] %vm1704, %v1699
  %1706 = vst.msk [vmem:[%s18 + $0x8] sm:$0xff] %vm1704, %v1701
  // Predicated region
  $region74: #{dastn_forward.1} parent=0 // pred_check
    _
  $region75: #{dastn_forward.1} parent=0 // pred_check_branch
    %1708 = sbr.rel (0) target = $region77
  $region76: #{dastn_forward.1} parent=0 // pred_region
    _
  $region77: #{dastn_forward.1} parent=0 // pred_fallthru
    _
  // Predicated region
  $region78: #{dastn_forward.1} parent=0 // pred_check
    _
  $region79: #{dastn_forward.1} parent=0 // pred_check_branch
    %1710 = sbr.rel (0) target = $region81
  $region80: #{dastn_forward.1} parent=0 // pred_region
    _
  $region81: #{dastn_forward.1} parent=0 // pred_fallthru
    _

</llo_original>
